<compile_context>
chip_gen: v7x
topology: tpu7x:2x2x1
jax: 0.10.0
libtpu: 0.0.40
codegen_flags: <defaults>
</compile_context>

<pallas_src>
import jax
import jax.numpy as jnp
from jax.experimental import pallas as pl
from jax.experimental.pallas import tpu as pltpu

BN_EPS = 1e-5


def _round_up(n, m):
    return ((n + m - 1) // m) * m


def _bn_tanh(z, gamma, beta):
    """Training-mode BatchNorm1d (biased variance) folded into one FMA, then tanh.

    Variance is computed as E[z^2] - E[z]^2 in f32 (single reduction pass),
    clamped at 0 and protected by eps. This is slightly less accurate than
    PyTorch's two-pass variance when |mean| >> std, which does not occur for
    these post-matmul activations. Returns bf16 so the next MXU dot consumes the
    activation directly (one live copy instead of f32 + bf16).
    """
    inv_n = 1.0 / z.shape[0]
    mean = jnp.sum(z, axis=0, keepdims=True) * inv_n
    var = jnp.maximum(jnp.sum(z * z, axis=0, keepdims=True) * inv_n - mean * mean, 0.0)
    scale = gamma * jax.lax.rsqrt(var + BN_EPS)
    shift = beta - mean * scale
    return jnp.tanh(z * scale + shift).astype(jnp.bfloat16)


def ngram_classifier_kernel(x_ref, w_in_ref, w1_ref, w2_ref, w3_ref, w_out_ref,
                            p_ref, out_ref, xpad_ref):
    # p_ref rows: 0=b_in, 1=gamma1, 2=beta1, 3=gamma2, 4=beta2, 5=gamma3,
    #             6=beta3, 7=output bias (lane 0 only)
    D = x_ref.shape[1]
    d_pad = xpad_ref.shape[1]
    h3_pad = w3_ref.shape[1]

    # In-kernel zero-pad (D -> d_pad) + f32->bf16 cast of the input. This
    # replaces the wrapper-side XLA pad/cast kernel (and its HBM round trip of x)
    # while keeping every matmul shape 128-aligned: masked store into a zeroed
    # bf16 scratch, then one aligned load. Padded lanes are exactly 0.
    if D == d_pad:
        xpad_ref[...] = x_ref[...].astype(jnp.bfloat16)
    else:
        xpad_ref[...] = jnp.zeros_like(xpad_ref)
        xpad_ref[:, :D] = x_ref[...].astype(jnp.bfloat16)
    x = xpad_ref[...]                                   # (B, d_pad) bf16

    # input linear + bias + tanh (bias kept: no BN follows this layer)
    h = jnp.dot(x, w_in_ref[...], preferred_element_type=jnp.float32)
    h = jnp.tanh(h + p_ref[0:1, :]).astype(jnp.bfloat16)

    # fc1 -> BN1 -> tanh   (b1/b2/b3 dropped: cancelled by BN mean subtraction)
    z = jnp.dot(h, w1_ref[...], preferred_element_type=jnp.float32)
    h = _bn_tanh(z, p_ref[1:2, :], p_ref[2:3, :])

    # fc2 -> BN2 -> tanh
    z = jnp.dot(h, w2_ref[...], preferred_element_type=jnp.float32)
    h = _bn_tanh(z, p_ref[3:4, :], p_ref[4:5, :])

    # fc3 -> BN3 -> tanh
    z = jnp.dot(h, w3_ref[...], preferred_element_type=jnp.float32)
    h = _bn_tanh(z, p_ref[5:6, :h3_pad], p_ref[6:7, :h3_pad])

    # output linear: weight padded to 128 columns only so the MXU dot stays
    # aligned (only column 0 is real); slice lane 0, add bias, sigmoid, and
    # write the (B, 1) result directly.
    logits = jnp.dot(h, w_out_ref[...], preferred_element_type=jnp.float32)
    out_ref[...] = jax.nn.sigmoid(logits[:, 0:1] + p_ref[7:8, 0:1])


def _vmem_budget_bytes(B, D, d_pad, h1_pad, h3_pad, out_pad):
    """vmem_limit_bytes sized from the actual buffers (plus 2x headroom for
    compiler temporaries), capped below v7x's 64 MiB physical VMEM."""
    weights = 2 * (d_pad * h1_pad + 2 * h1_pad * h1_pad
                   + h1_pad * h3_pad + h3_pad * out_pad)          # bf16 weight slabs
    params = 4 * 8 * h1_pad                                       # f32 param slab
    x_in = 4 * _round_up(B, 8) * _round_up(D, 128)                # f32 input buffer
    xpad = 2 * _round_up(B, 16) * d_pad                           # bf16 scratch
    out = 4 * _round_up(B, 8) * 128                               # f32 (B,1) buffer
    acts = _round_up(B, 8) * h1_pad * (2 * 4 + 2)                 # live f32/bf16 activations
    total = weights + params + x_in + xpad + out + acts
    return int(min(max(2 * total, 16 * 1024 * 1024), 60 * 1024 * 1024))


def ngram_classifier_forward(x, params):
    """x: (B, D) float32. Returns (B, 1) float32 probabilities."""
    B, D = x.shape
    d_pad, h1_pad = params["w_in"].shape
    h3_pad, out_pad = params["w_out"].shape

    args = (x, params["w_in"], params["w1"], params["w2"], params["w3"],
            params["w_out"], params["p"])
    vmem = pl.BlockSpec(memory_space=pltpu.MemorySpace.VMEM)

    return pl.pallas_call(
        ngram_classifier_kernel,
        out_shape=jax.ShapeDtypeStruct((B, 1), jnp.float32),
        in_specs=[vmem] * len(args),
        out_specs=vmem,
        scratch_shapes=[pltpu.VMEM((B, d_pad), jnp.bfloat16)],
        compiler_params=pltpu.CompilerParams(
            vmem_limit_bytes=_vmem_budget_bytes(B, D, d_pad, h1_pad, h3_pad, out_pad)),
    )(*args)


def init_params(key, d_input_dim, pad=128):
    """PyTorch-like init, padded to 128-multiples, weights stored (in, out) bf16.

    Invariant: all padded weight rows/cols, biases, gammas and betas are exactly
    zero, so padded lanes remain exactly zero through every layer.
    """
    h1 = d_input_dim // 2
    h3 = h1 // 2
    d_pad = _round_up(d_input_dim, pad)
    h1_pad = _round_up(h1, pad)
    h3_pad = _round_up(h3, pad)
    out_pad = pad

    def linear(k, fan_in, fan_out, rows_pad, cols_pad):
        kw, kb = jax.random.split(k)
        bound = 1.0 / (fan_in ** 0.5)
        w = jax.random.uniform(kw, (fan_in, fan_out), jnp.float32, -bound, bound)
        b = jax.random.uniform(kb, (fan_out,), jnp.float32, -bound, bound)
        w_p = (jnp.zeros((rows_pad, cols_pad), jnp.float32)
               .at[:fan_in, :fan_out].set(w).astype(jnp.bfloat16))
        return w, b, w_p

    keys = jax.random.split(key, 5)
    w_in, b_in, w_in_p = linear(keys[0], d_input_dim, h1, d_pad, h1_pad)
    w1, b1, w1_p = linear(keys[1], h1, h1, h1_pad, h1_pad)
    w2, b2, w2_p = linear(keys[2], h1, h1, h1_pad, h1_pad)
    w3, b3, w3_p = linear(keys[3], h1, h3, h1_pad, h3_pad)
    w_out, b_out, w_out_p = linear(keys[4], h3, 1, h3_pad, out_pad)

    # Coalesced small-parameter slab (f32): biases / BN gammas / BN betas.
    # b1/b2/b3 are intentionally omitted (dead math under training-mode BN).
    p = jnp.zeros((8, h1_pad), jnp.float32)
    p = p.at[0, :h1].set(b_in)        # input bias
    p = p.at[1, :h1].set(1.0)         # gamma1 (beta1 row 2 stays 0)
    p = p.at[3, :h1].set(1.0)         # gamma2 (beta2 row 4 stays 0)
    p = p.at[5, :h3].set(1.0)         # gamma3 (beta3 row 6 stays 0)
    p = p.at[7, 0].set(b_out[0])      # output bias (lane 0 only)

    ref = dict(w_in=w_in, b_in=b_in, w1=w1, b1=b1, w2=w2, b2=b2,
               w3=w3, b3=b3, w_out=w_out, b_out=b_out)
    return dict(w_in=w_in_p, w1=w1_p, w2=w2_p, w3=w3_p, w_out=w_out_p,
                p=p, ref=ref)


def reference_matched(x, params):
    """Pure-JAX reference with the *same* math as the kernel (bf16 matmuls,
    folded training-mode BN, lane-0 output bias)."""
    B, D = x.shape
    d_pad = params["w_in"].shape[0]
    h3_pad = params["w3"].shape[1]
    p = params["p"]
    x_p = jnp.zeros((B, d_pad), jnp.bfloat16).at[:, :D].set(x.astype(jnp.bfloat16))

    h = jnp.tanh(jnp.dot(x_p, params["w_in"], preferred_element_type=jnp.float32)
                 + p[0:1, :]).astype(jnp.bfloat16)
    z = jnp.dot(h, params["w1"], preferred_element_type=jnp.float32)
    h = _bn_tanh(z, p[1:2, :], p[2:3, :])
    z = jnp.dot(h, params["w2"], preferred_element_type=jnp.float32)
    h = _bn_tanh(z, p[3:4, :], p[4:5, :])
    z = jnp.dot(h, params["w3"], preferred_element_type=jnp.float32)
    h = _bn_tanh(z, p[5:6, :h3_pad], p[6:7, :h3_pad])
    logits = jnp.dot(h, params["w_out"], preferred_element_type=jnp.float32)
    return jax.nn.sigmoid(logits[:, 0:1] + p[7:8, 0:1])


def reference_spec(x, r):
    """Full-precision f32 reference mirroring the PyTorch module exactly
    (including the b1/b2/b3 biases, which cancel under training-mode BN)."""
    def bn(h, gamma, beta):
        m = jnp.mean(h, axis=0, keepdims=True)
        v = jnp.mean((h - m) ** 2, axis=0, keepdims=True)
        return (h - m) / jnp.sqrt(v + BN_EPS) * gamma + beta

    h = jnp.tanh(x @ r["w_in"] + r["b_in"])
    h = jnp.tanh(bn(h @ r["w1"] + r["b1"], 1.0, 0.0))
    h = jnp.tanh(bn(h @ r["w2"] + r["b2"], 1.0, 0.0))
    h = jnp.tanh(bn(h @ r["w3"] + r["b3"], 1.0, 0.0))
    return jax.nn.sigmoid(h @ r["w_out"] + r["b_out"])


if __name__ == "__main__":
    D_INPUT = 350   # module default (internally pads 350->384, 175->256, 87->128)
    BATCH = 16      # small test batch; throughput scales ~linearly with batch
                    # until the MXU M dimension (128/256 rows) is filled.

    key = jax.random.PRNGKey(0)
    kx, kp = jax.random.split(key)
    x = jax.random.normal(kx, (BATCH, D_INPUT), jnp.float32)
    params = init_params(kp, D_INPUT)

    out = ngram_classifier_forward(x, params)
    out = jax.block_until_ready(out)
    assert out.shape == (BATCH, 1), out.shape

    # exact-math check (same bf16 dots / fused BN as the kernel)
    ref_m = reference_matched(x, params)
    assert jnp.allclose(out, ref_m, atol=2e-3, rtol=2e-3), \
        float(jnp.max(jnp.abs(out - ref_m)))

    # semantics check against the full-f32 PyTorch-style reference
    # (loose tolerance only accounts for bf16 matmul operand rounding)
    ref_f = reference_spec(x, params["ref"])
    assert jnp.allclose(out, ref_f, atol=5e-2), \
        float(jnp.max(jnp.abs(out - ref_f)))

    print("KERNEL_OK")
</pallas_src>

<mosaic_0001>
module attributes {stable_mosaic.version = 11 : i64} {
  func.func @ngram_classifier_kernel(%arg0: memref<16x350xf32, #tpu.memory_space<vmem>>, %arg1: memref<384x256xbf16, #tpu.memory_space<vmem>>, %arg2: memref<256x256xbf16, #tpu.memory_space<vmem>>, %arg3: memref<256x256xbf16, #tpu.memory_space<vmem>>, %arg4: memref<256x128xbf16, #tpu.memory_space<vmem>>, %arg5: memref<128x128xbf16, #tpu.memory_space<vmem>>, %arg6: memref<8x256xf32, #tpu.memory_space<vmem>>, %arg7: memref<16x1xf32, #tpu.memory_space<vmem>>, %arg8: memref<16x384xbf16, #tpu.memory_space<vmem>>) attributes {dimension_semantics = [], scalar_prefetch = 0 : i64, scratch_operands = 1 : i64, tpu.core_type = #tpu.core_type<tc>} {
    %cst = arith.constant 0.000000e+00 : bf16
    %0 = vector.broadcast %cst : bf16 to vector<16x384xbf16>
    %c0 = arith.constant 0 : index
    %c0_0 = arith.constant 0 : index
    %1 = vector.load %arg8[%c0, %c0_0] : memref<16x384xbf16, #tpu.memory_space<vmem>>, vector<16x384xbf16>
    tpu.vector_store %arg8[%c0, %c0_0], %0 {strides = array<i32>} : memref<16x384xbf16, #tpu.memory_space<vmem>>, vector<16x384xbf16>,
    %c0_1 = arith.constant 0 : index
    %c0_2 = arith.constant 0 : index
    %2 = vector.load %arg0[%c0_1, %c0_2] : memref<16x350xf32, #tpu.memory_space<vmem>>, vector<16x350xf32>
    %3 = arith.truncf %2 : vector<16x350xf32> to vector<16x350xbf16>
    %c0_3 = arith.constant 0 : index
    %c0_4 = arith.constant 0 : index
    %4 = vector.load %arg8[%c0_3, %c0_4] : memref<16x384xbf16, #tpu.memory_space<vmem>>, vector<16x350xbf16>
    tpu.vector_store %arg8[%c0_3, %c0_4], %3 {strides = array<i32>} : memref<16x384xbf16, #tpu.memory_space<vmem>>, vector<16x350xbf16>,
    %c0_5 = arith.constant 0 : index
    %c0_6 = arith.constant 0 : index
    %5 = vector.load %arg8[%c0_5, %c0_6] : memref<16x384xbf16, #tpu.memory_space<vmem>>, vector<16x384xbf16>
    %c0_7 = arith.constant 0 : index
    %c0_8 = arith.constant 0 : index
    %6 = vector.load %arg1[%c0_7, %c0_8] : memref<384x256xbf16, #tpu.memory_space<vmem>>, vector<384x256xbf16>
    %cst_9 = arith.constant dense<0.000000e+00> : vector<16x256xf32>
    %7 = tpu.matmul %5, %6, %cst_9 {dimension_numbers = #tpu.dot_dimension_numbers<[1], [0], [0], [1], [0, 0, 1, 1], [], []>} : vector<16x384xbf16>, vector<384x256xbf16>, vector<16x256xf32> -> vector<16x256xf32>
    %c0_10 = arith.constant 0 : index
    %c0_11 = arith.constant 0 : index
    %8 = vector.load %arg6[%c0_10, %c0_11] : memref<8x256xf32, #tpu.memory_space<vmem>>, vector<1x256xf32>
    %9 = vector.broadcast %8 : vector<1x256xf32> to vector<16x256xf32>
    %10 = arith.addf %7, %9 : vector<16x256xf32>
    %11 = math.tanh %10 : vector<16x256xf32>
    %12 = arith.truncf %11 : vector<16x256xf32> to vector<16x256xbf16>
    %c0_12 = arith.constant 0 : index
    %c0_13 = arith.constant 0 : index
    %13 = vector.load %arg2[%c0_12, %c0_13] : memref<256x256xbf16, #tpu.memory_space<vmem>>, vector<256x256xbf16>
    %cst_14 = arith.constant dense<0.000000e+00> : vector<16x256xf32>
    %14 = tpu.matmul %12, %13, %cst_14 {dimension_numbers = #tpu.dot_dimension_numbers<[1], [0], [0], [1], [0, 0, 1, 1], [], []>} : vector<16x256xbf16>, vector<256x256xbf16>, vector<16x256xf32> -> vector<16x256xf32>
    %c1 = arith.constant 1 : index
    %c0_15 = arith.constant 0 : index
    %15 = vector.load %arg6[%c1, %c0_15] : memref<8x256xf32, #tpu.memory_space<vmem>>, vector<1x256xf32>
    %c2 = arith.constant 2 : index
    %c0_16 = arith.constant 0 : index
    %16 = vector.load %arg6[%c2, %c0_16] : memref<8x256xf32, #tpu.memory_space<vmem>>, vector<1x256xf32>
    %cst_17 = arith.constant dense<0.000000e+00> : vector<256xf32>
    %17 = vector.multi_reduction <add>, %14, %cst_17 [0] : vector<16x256xf32> to vector<256xf32>
    %18 = vector.shape_cast %17 : vector<256xf32> to vector<1x256xf32>
    %cst_18 = arith.constant 6.250000e-02 : f32
    %19 = vector.broadcast %cst_18 : f32 to vector<1x256xf32>
    %20 = arith.mulf %18, %19 : vector<1x256xf32>
    %21 = arith.mulf %14, %14 : vector<16x256xf32>
    %cst_19 = arith.constant dense<0.000000e+00> : vector<256xf32>
    %22 = vector.multi_reduction <add>, %21, %cst_19 [0] : vector<16x256xf32> to vector<256xf32>
    %23 = vector.shape_cast %22 : vector<256xf32> to vector<1x256xf32>
    %cst_20 = arith.constant 6.250000e-02 : f32
    %24 = vector.broadcast %cst_20 : f32 to vector<1x256xf32>
    %25 = arith.mulf %23, %24 : vector<1x256xf32>
    %26 = arith.mulf %20, %20 : vector<1x256xf32>
    %27 = arith.subf %25, %26 : vector<1x256xf32>
    %cst_21 = arith.constant 0.000000e+00 : f32
    %28 = vector.broadcast %cst_21 : f32 to vector<1x256xf32>
    %29 = arith.maximumf %27, %28 : vector<1x256xf32>
    %cst_22 = arith.constant 9.99999974E-6 : f32
    %30 = vector.broadcast %cst_22 : f32 to vector<1x256xf32>
    %31 = arith.addf %29, %30 : vector<1x256xf32>
    %32 = math.rsqrt %31 : vector<1x256xf32>
    %33 = arith.mulf %15, %32 : vector<1x256xf32>
    %34 = arith.mulf %20, %33 : vector<1x256xf32>
    %35 = arith.subf %16, %34 : vector<1x256xf32>
    %36 = vector.broadcast %33 : vector<1x256xf32> to vector<16x256xf32>
    %37 = arith.mulf %14, %36 : vector<16x256xf32>
    %38 = vector.broadcast %35 : vector<1x256xf32> to vector<16x256xf32>
    %39 = arith.addf %37, %38 : vector<16x256xf32>
    %40 = math.tanh %39 : vector<16x256xf32>
    %41 = arith.truncf %40 : vector<16x256xf32> to vector<16x256xbf16>
    %c0_23 = arith.constant 0 : index
    %c0_24 = arith.constant 0 : index
    %42 = vector.load %arg3[%c0_23, %c0_24] : memref<256x256xbf16, #tpu.memory_space<vmem>>, vector<256x256xbf16>
    %cst_25 = arith.constant dense<0.000000e+00> : vector<16x256xf32>
    %43 = tpu.matmul %41, %42, %cst_25 {dimension_numbers = #tpu.dot_dimension_numbers<[1], [0], [0], [1], [0, 0, 1, 1], [], []>} : vector<16x256xbf16>, vector<256x256xbf16>, vector<16x256xf32> -> vector<16x256xf32>
    %c3 = arith.constant 3 : index
    %c0_26 = arith.constant 0 : index
    %44 = vector.load %arg6[%c3, %c0_26] : memref<8x256xf32, #tpu.memory_space<vmem>>, vector<1x256xf32>
    %c4 = arith.constant 4 : index
    %c0_27 = arith.constant 0 : index
    %45 = vector.load %arg6[%c4, %c0_27] : memref<8x256xf32, #tpu.memory_space<vmem>>, vector<1x256xf32>
    %cst_28 = arith.constant dense<0.000000e+00> : vector<256xf32>
    %46 = vector.multi_reduction <add>, %43, %cst_28 [0] : vector<16x256xf32> to vector<256xf32>
    %47 = vector.shape_cast %46 : vector<256xf32> to vector<1x256xf32>
    %cst_29 = arith.constant 6.250000e-02 : f32
    %48 = vector.broadcast %cst_29 : f32 to vector<1x256xf32>
    %49 = arith.mulf %47, %48 : vector<1x256xf32>
    %50 = arith.mulf %43, %43 : vector<16x256xf32>
    %cst_30 = arith.constant dense<0.000000e+00> : vector<256xf32>
    %51 = vector.multi_reduction <add>, %50, %cst_30 [0] : vector<16x256xf32> to vector<256xf32>
    %52 = vector.shape_cast %51 : vector<256xf32> to vector<1x256xf32>
    %cst_31 = arith.constant 6.250000e-02 : f32
    %53 = vector.broadcast %cst_31 : f32 to vector<1x256xf32>
    %54 = arith.mulf %52, %53 : vector<1x256xf32>
    %55 = arith.mulf %49, %49 : vector<1x256xf32>
    %56 = arith.subf %54, %55 : vector<1x256xf32>
    %cst_32 = arith.constant 0.000000e+00 : f32
    %57 = vector.broadcast %cst_32 : f32 to vector<1x256xf32>
    %58 = arith.maximumf %56, %57 : vector<1x256xf32>
    %cst_33 = arith.constant 9.99999974E-6 : f32
    %59 = vector.broadcast %cst_33 : f32 to vector<1x256xf32>
    %60 = arith.addf %58, %59 : vector<1x256xf32>
    %61 = math.rsqrt %60 : vector<1x256xf32>
    %62 = arith.mulf %44, %61 : vector<1x256xf32>
    %63 = arith.mulf %49, %62 : vector<1x256xf32>
    %64 = arith.subf %45, %63 : vector<1x256xf32>
    %65 = vector.broadcast %62 : vector<1x256xf32> to vector<16x256xf32>
    %66 = arith.mulf %43, %65 : vector<16x256xf32>
    %67 = vector.broadcast %64 : vector<1x256xf32> to vector<16x256xf32>
    %68 = arith.addf %66, %67 : vector<16x256xf32>
    %69 = math.tanh %68 : vector<16x256xf32>
    %70 = arith.truncf %69 : vector<16x256xf32> to vector<16x256xbf16>
    %c0_34 = arith.constant 0 : index
    %c0_35 = arith.constant 0 : index
    %71 = vector.load %arg4[%c0_34, %c0_35] : memref<256x128xbf16, #tpu.memory_space<vmem>>, vector<256x128xbf16>
    %cst_36 = arith.constant dense<0.000000e+00> : vector<16x128xf32>
    %72 = tpu.matmul %70, %71, %cst_36 {dimension_numbers = #tpu.dot_dimension_numbers<[1], [0], [0], [1], [0, 0, 1, 1], [], []>} : vector<16x256xbf16>, vector<256x128xbf16>, vector<16x128xf32> -> vector<16x128xf32>
    %c5 = arith.constant 5 : index
    %c0_37 = arith.constant 0 : index
    %73 = vector.load %arg6[%c5, %c0_37] : memref<8x256xf32, #tpu.memory_space<vmem>>, vector<1x128xf32>
    %c6 = arith.constant 6 : index
    %c0_38 = arith.constant 0 : index
    %74 = vector.load %arg6[%c6, %c0_38] : memref<8x256xf32, #tpu.memory_space<vmem>>, vector<1x128xf32>
    %cst_39 = arith.constant dense<0.000000e+00> : vector<128xf32>
    %75 = vector.multi_reduction <add>, %72, %cst_39 [0] : vector<16x128xf32> to vector<128xf32>
    %76 = vector.shape_cast %75 : vector<128xf32> to vector<1x128xf32>
    %cst_40 = arith.constant 6.250000e-02 : f32
    %77 = vector.broadcast %cst_40 : f32 to vector<1x128xf32>
    %78 = arith.mulf %76, %77 : vector<1x128xf32>
    %79 = arith.mulf %72, %72 : vector<16x128xf32>
    %cst_41 = arith.constant dense<0.000000e+00> : vector<128xf32>
    %80 = vector.multi_reduction <add>, %79, %cst_41 [0] : vector<16x128xf32> to vector<128xf32>
    %81 = vector.shape_cast %80 : vector<128xf32> to vector<1x128xf32>
    %cst_42 = arith.constant 6.250000e-02 : f32
    %82 = vector.broadcast %cst_42 : f32 to vector<1x128xf32>
    %83 = arith.mulf %81, %82 : vector<1x128xf32>
    %84 = arith.mulf %78, %78 : vector<1x128xf32>
    %85 = arith.subf %83, %84 : vector<1x128xf32>
    %cst_43 = arith.constant 0.000000e+00 : f32
    %86 = vector.broadcast %cst_43 : f32 to vector<1x128xf32>
    %87 = arith.maximumf %85, %86 : vector<1x128xf32>
    %cst_44 = arith.constant 9.99999974E-6 : f32
    %88 = vector.broadcast %cst_44 : f32 to vector<1x128xf32>
    %89 = arith.addf %87, %88 : vector<1x128xf32>
    %90 = math.rsqrt %89 : vector<1x128xf32>
    %91 = arith.mulf %73, %90 : vector<1x128xf32>
    %92 = arith.mulf %78, %91 : vector<1x128xf32>
    %93 = arith.subf %74, %92 : vector<1x128xf32>
    %94 = vector.broadcast %91 : vector<1x128xf32> to vector<16x128xf32>
    %95 = arith.mulf %72, %94 : vector<16x128xf32>
    %96 = vector.broadcast %93 : vector<1x128xf32> to vector<16x128xf32>
    %97 = arith.addf %95, %96 : vector<16x128xf32>
    %98 = math.tanh %97 : vector<16x128xf32>
    %99 = arith.truncf %98 : vector<16x128xf32> to vector<16x128xbf16>
    %c0_45 = arith.constant 0 : index
    %c0_46 = arith.constant 0 : index
    %100 = vector.load %arg5[%c0_45, %c0_46] : memref<128x128xbf16, #tpu.memory_space<vmem>>, vector<128x128xbf16>
    %cst_47 = arith.constant dense<0.000000e+00> : vector<16x128xf32>
    %101 = tpu.matmul %99, %100, %cst_47 {dimension_numbers = #tpu.dot_dimension_numbers<[1], [0], [0], [1], [0, 0, 1, 1], [], []>} : vector<16x128xbf16>, vector<128x128xbf16>, vector<16x128xf32> -> vector<16x128xf32>
    %102 = vector.extract_strided_slice %101 {offsets = [0, 0], sizes = [16, 1], strides = [1, 1]} : vector<16x128xf32> to vector<16x1xf32>
    %c7 = arith.constant 7 : index
    %c0_48 = arith.constant 0 : index
    %103 = vector.load %arg6[%c7, %c0_48] : memref<8x256xf32, #tpu.memory_space<vmem>>, vector<1x1xf32>
    %104 = vector.broadcast %103 : vector<1x1xf32> to vector<16x1xf32>
    %105 = arith.addf %102, %104 : vector<16x1xf32>
    %106 = arith.negf %105 : vector<16x1xf32>
    %107 = math.exp %106 : vector<16x1xf32>
    %cst_49 = arith.constant 1.000000e+00 : f32
    %108 = vector.broadcast %cst_49 : f32 to vector<16x1xf32>
    %109 = arith.addf %108, %107 : vector<16x1xf32>
    %110 = arith.divf %108, %109 : vector<16x1xf32>
    %c0_50 = arith.constant 0 : index
    %c0_51 = arith.constant 0 : index
    %111 = vector.load %arg7[%c0_50, %c0_51] : memref<16x1xf32, #tpu.memory_space<vmem>>, vector<16x1xf32>
    tpu.vector_store %arg7[%c0_50, %c0_51], %110 {strides = array<i32>} : memref<16x1xf32, #tpu.memory_space<vmem>>, vector<16x1xf32>,
    return
  }
}

</mosaic_0001>

<llo_original>
// kernel: tpu_custom_call.1
$region0: #{tpu_custom_call.1}
  #allocation0 [shape = 'u32[]', space=smem, size = 0x4, offset = 0x4, fixed_abs, tag = 'smem constant byte address 0x4 - core index']
  #allocation1 [shape = 'u32[144,128]{1,0:T(1,128)}', space=vmem, size = 0x12000, scoped, tag = 'internal scratch']
  #allocation2 [shape = 'bf16[16,384]{1,0:T(16,128)(2,1)}', space=vmem, size = 0x3000, scoped, tag = 'scratch operand']
  %s0 = inlined_call_operand.hbm [shape: f32[16,350], index: 0, kind: input, shape index: {}]
  %s1 = inlined_call_operand.hbm [shape: bf16[384,256], index: 1, kind: input, shape index: {}]
  %s2 = inlined_call_operand.hbm [shape: bf16[256,256], index: 2, kind: input, shape index: {}]
  %s3 = inlined_call_operand.hbm [shape: bf16[256,256], index: 3, kind: input, shape index: {}]
  %s4 = inlined_call_operand.hbm [shape: bf16[256,128], index: 4, kind: input, shape index: {}]
  %s5 = inlined_call_operand.hbm [shape: bf16[128,128], index: 5, kind: input, shape index: {}]
  %s6 = inlined_call_operand.vmem [shape: f32[8,256], index: 6, kind: input, shape index: {}]
  %s7 = inlined_call_operand.vmem [shape: f32[16,1], index: 7, kind: output, shape index: {}]
  %s8 = sld [smem:[#allocation0]]
  $region62: #{tpu_custom_call.1} parent=0
    _
  %s10 = ssub.s32 1, %s8
  %s11 = scalar_select 0, %s10, %s8
  $region1: #{tpu_custom_call.1} parent=0
    #allocation3 [shape = 'u8[24576]{0}', space=vmem, size = 0x6000, scoped, tag = 'input window, operand 0, single buffered']
    #allocation4 [shape = 's32[1]{0}', space=sflag, size = 0x4, scoped, tag = 'scoped memory for tpu_custom_call.1']
    #allocation5 [shape = 'u8[196608]{0}', space=vmem, size = 0x30000, scoped, tag = 'input window, operand 1, single buffered']
    #allocation6 [shape = 's32[1]{0}', space=sflag, size = 0x4, scoped, tag = 'scoped memory for tpu_custom_call.1']
    #allocation7 [shape = 'u8[131072]{0}', space=vmem, size = 0x20000, scoped, tag = 'input window, operand 2, single buffered']
    #allocation8 [shape = 'u8[131072]{0}', space=vmem, size = 0x20000, scoped, tag = 'input window, operand 3, single buffered']
    #allocation9 [shape = 's32[1]{0}', space=sflag, size = 0x4, scoped, tag = 'scoped memory for tpu_custom_call.1']
    #allocation10 [shape = 'u8[65536]{0}', space=vmem, size = 0x10000, scoped, tag = 'input window, operand 4, single buffered']
    #allocation11 [shape = 'u8[32768]{0}', space=vmem, size = 0x8000, scoped, tag = 'input window, operand 5, single buffered']
    #allocation12 [shape = 's32[1]{0}', space=sflag, size = 0x4, scoped, tag = 'scoped memory for tpu_custom_call.1']
    %12 = vsyncpa [#allocation4], 0
    %13 = vsyncpa [#allocation6], 0
    %14 = vsyncpa [#allocation9], 0
    %15 = vsyncpa [#allocation12], 0
    // Predicated region
    $region2: #{tpu_custom_call.1} parent=1 // pred_check
      _
    $region3: #{tpu_custom_call.1} parent=1 // pred_check_branch
      %17 = sbr.rel (0) target = $region5
    $region4: #{tpu_custom_call.1} parent=1 // pred_region
      %s19 = ssub.s32 768, 768
      %20 = vsyncadd [#allocation4], %s19
      %s21 = sshll.u32 [#allocation3], 4
      %s22 = int_to_ptr.vmem [resolvable:$true] %s21
      %27 = dma.hbm_to_vmem [thread:$0]  %s0, 768, %s22, [#allocation4], 384, 384, 24
    $region5: #{tpu_custom_call.1} parent=1 // pred_fallthru
      _
    // Predicated region
    $region6: #{tpu_custom_call.1} parent=1 // pred_check
      _
    $region7: #{tpu_custom_call.1} parent=1 // pred_check_branch
      %29 = sbr.rel (0) target = $region9
    $region8: #{tpu_custom_call.1} parent=1 // pred_region
      %s31 = ssub.s32 6144, 6144
      %32 = vsyncadd [#allocation6], %s31
      %s33 = sshll.u32 [#allocation5], 4
      %s34 = int_to_ptr.vmem [resolvable:$true] %s33
      %39 = dma.hbm_to_vmem [thread:$0]  %s1, 6144, %s34, [#allocation6], 128, 128, 8
    $region9: #{tpu_custom_call.1} parent=1 // pred_fallthru
      _
    // Predicated region
    $region10: #{tpu_custom_call.1} parent=1 // pred_check
      _
    $region11: #{tpu_custom_call.1} parent=1 // pred_check_branch
      %41 = sbr.rel (0) target = $region13
    $region12: #{tpu_custom_call.1} parent=1 // pred_region
      %s43 = ssub.s32 4096, 4096
      %44 = vsyncadd [#allocation6], %s43
      %s45 = sshll.u32 [#allocation7], 4
      %s46 = int_to_ptr.vmem [resolvable:$true] %s45
      %51 = dma.hbm_to_vmem [thread:$0]  %s2, 4096, %s46, [#allocation6], 128, 128, 8
    $region13: #{tpu_custom_call.1} parent=1 // pred_fallthru
      _
    // Predicated region
    $region14: #{tpu_custom_call.1} parent=1 // pred_check
      _
    $region15: #{tpu_custom_call.1} parent=1 // pred_check_branch
      %53 = sbr.rel (0) target = $region17
    $region16: #{tpu_custom_call.1} parent=1 // pred_region
      %s55 = ssub.s32 4096, 4096
      %56 = vsyncadd [#allocation9], %s55
      %s57 = sshll.u32 [#allocation8], 4
      %s58 = int_to_ptr.vmem [resolvable:$true] %s57
      %63 = dma.hbm_to_vmem [thread:$0]  %s3, 4096, %s58, [#allocation9], 128, 128, 8
    $region17: #{tpu_custom_call.1} parent=1 // pred_fallthru
      _
    // Predicated region
    $region18: #{tpu_custom_call.1} parent=1 // pred_check
      _
    $region19: #{tpu_custom_call.1} parent=1 // pred_check_branch
      %65 = sbr.rel (0) target = $region21
    $region20: #{tpu_custom_call.1} parent=1 // pred_region
      %s67 = ssub.s32 2048, 2048
      %68 = vsyncadd [#allocation9], %s67
      %s69 = sshll.u32 [#allocation10], 4
      %s70 = int_to_ptr.vmem [resolvable:$true] %s69
      %75 = dma.hbm_to_vmem [thread:$0]  %s4, 2048, %s70, [#allocation9], 64, 64, 4
    $region21: #{tpu_custom_call.1} parent=1 // pred_fallthru
      _
    // Predicated region
    $region22: #{tpu_custom_call.1} parent=1 // pred_check
      _
    $region23: #{tpu_custom_call.1} parent=1 // pred_check_branch
      %77 = sbr.rel (0) target = $region25
    $region24: #{tpu_custom_call.1} parent=1 // pred_region
      %s79 = ssub.s32 1024, 1024
      %80 = vsyncadd [#allocation12], %s79
      %s81 = sshll.u32 [#allocation11], 4
      %s82 = int_to_ptr.vmem [resolvable:$true] %s81
      %87 = dma.hbm_to_vmem [thread:$0]  %s5, 1024, %s82, [#allocation12], 64, 64, 4
    $region25: #{tpu_custom_call.1} parent=1 // pred_fallthru
      _
    // Predicated region
    $region26: #{tpu_custom_call.1} parent=1 // pred_check
      _
    $region27: #{tpu_custom_call.1} parent=1 // pred_check_branch
      %89 = sbr.rel (0) target = $region29
    $region28: #{tpu_custom_call.1} parent=1 // pred_region
      _
    $region29: #{tpu_custom_call.1} parent=1 // pred_fallthru
      _
    // Predicated region
    $region30: #{tpu_custom_call.1} parent=1 // pred_check
      _
    $region31: #{tpu_custom_call.1} parent=1 // pred_check_branch
      %91 = sbr.rel (0) target = $region33
    $region32: #{tpu_custom_call.1} parent=1 // pred_region
      %92 = dma.done [#allocation4], 768
    $region33: #{tpu_custom_call.1} parent=1 // pred_fallthru
      _
    // Predicated region
    $region34: #{tpu_custom_call.1} parent=1 // pred_check
      _
    $region35: #{tpu_custom_call.1} parent=1 // pred_check_branch
      %94 = sbr.rel (0) target = $region37
    $region36: #{tpu_custom_call.1} parent=1 // pred_region
      %95 = dma.done [#allocation6], 6144
    $region37: #{tpu_custom_call.1} parent=1 // pred_fallthru
      _
    // Predicated region
    $region38: #{tpu_custom_call.1} parent=1 // pred_check
      _
    $region39: #{tpu_custom_call.1} parent=1 // pred_check_branch
      %97 = sbr.rel (0) target = $region41
    $region40: #{tpu_custom_call.1} parent=1 // pred_region
      %98 = dma.done [#allocation6], 4096
    $region41: #{tpu_custom_call.1} parent=1 // pred_fallthru
      _
    // Predicated region
    $region42: #{tpu_custom_call.1} parent=1 // pred_check
      _
    $region43: #{tpu_custom_call.1} parent=1 // pred_check_branch
      %100 = sbr.rel (0) target = $region45
    $region44: #{tpu_custom_call.1} parent=1 // pred_region
      %101 = dma.done [#allocation9], 4096
    $region45: #{tpu_custom_call.1} parent=1 // pred_fallthru
      _
    // Predicated region
    $region46: #{tpu_custom_call.1} parent=1 // pred_check
      _
    $region47: #{tpu_custom_call.1} parent=1 // pred_check_branch
      %103 = sbr.rel (0) target = $region49
    $region48: #{tpu_custom_call.1} parent=1 // pred_region
      %104 = dma.done [#allocation9], 2048
    $region49: #{tpu_custom_call.1} parent=1 // pred_fallthru
      _
    // Predicated region
    $region50: #{tpu_custom_call.1} parent=1 // pred_check
      _
    $region51: #{tpu_custom_call.1} parent=1 // pred_check_branch
      %106 = sbr.rel (0) target = $region53
    $region52: #{tpu_custom_call.1} parent=1 // pred_region
      %107 = dma.done [#allocation12], 1024
    $region53: #{tpu_custom_call.1} parent=1 // pred_fallthru
      _
    %109 = vst [vmem:[#allocation2] sm:$0xff] 0
    %110 = vst [vmem:[#allocation2 + $0x8] sm:$0xff] 0
    %111 = vst [vmem:[#allocation2 + $0x10] sm:$0xff] 0
    %v112 = vld [vmem:[#allocation3] sm:$0xff]
    %v113 = vld [vmem:[#allocation3 + $0x8] sm:$0xff]
    %v114 = vld [vmem:[#allocation3 + $0x10] sm:$0xff]
    %v115 = vld [vmem:[#allocation3 + $0x18] sm:$0xff]
    %v116 = vld [vmem:[#allocation3 + $0x20] sm:$0xff]
    %v117 = vld [vmem:[#allocation3 + $0x28] sm:$0xff]
    %v118 = vpack.c.bf16 %v115, %v112
    %v119 = vpack.c.bf16 %v116, %v113
    %v120 = vpack.c.bf16 %v117, %v114
    %121 = vst [vmem:[#allocation2] sm:$0xff] %v118
    %122 = vst [vmem:[#allocation2 + $0x8] sm:$0xff] %v119
    %vm123 = vcmask 769024
    %124 = vst.msk [vmem:[#allocation2 + $0x10] sm:$0xff] %vm123, %v120
    %v125 = vld [vmem:[#allocation2] sm:$0xff]
    %v126 = vld [vmem:[#allocation2 + $0x8] sm:$0xff]
    %v127 = vld [vmem:[#allocation2 + $0x10] sm:$0xff]
    %v128 = vld [vmem:[#allocation5] sm:$0xff]
    %v129 = vld [vmem:[#allocation5 + $0x8] sm:$0xff]
    %v130 = vld [vmem:[#allocation5 + $0x10] sm:$0xff]
    %v131 = vld [vmem:[#allocation5 + $0x18] sm:$0xff]
    %v132 = vld [vmem:[#allocation5 + $0x20] sm:$0xff]
    %v133 = vld [vmem:[#allocation5 + $0x28] sm:$0xff]
    %v134 = vld [vmem:[#allocation5 + $0x30] sm:$0xff]
    %v135 = vld [vmem:[#allocation5 + $0x38] sm:$0xff]
    %v136 = vld [vmem:[#allocation5 + $0x40] sm:$0xff]
    %v137 = vld [vmem:[#allocation5 + $0x48] sm:$0xff]
    %v138 = vld [vmem:[#allocation5 + $0x50] sm:$0xff]
    %v139 = vld [vmem:[#allocation5 + $0x58] sm:$0xff]
    %v140 = vld [vmem:[#allocation5 + $0x60] sm:$0xff]
    %v141 = vld [vmem:[#allocation5 + $0x68] sm:$0xff]
    %v142 = vld [vmem:[#allocation5 + $0x70] sm:$0xff]
    %v143 = vld [vmem:[#allocation5 + $0x78] sm:$0xff]
    %v144 = vld [vmem:[#allocation5 + $0x80] sm:$0xff]
    %v145 = vld [vmem:[#allocation5 + $0x88] sm:$0xff]
    %v146 = vld [vmem:[#allocation5 + $0x90] sm:$0xff]
    %v147 = vld [vmem:[#allocation5 + $0x98] sm:$0xff]
    %v148 = vld [vmem:[#allocation5 + $0xa0] sm:$0xff]
    %v149 = vld [vmem:[#allocation5 + $0xa8] sm:$0xff]
    %v150 = vld [vmem:[#allocation5 + $0xb0] sm:$0xff]
    %v151 = vld [vmem:[#allocation5 + $0xb8] sm:$0xff]
    %v152 = vld [vmem:[#allocation5 + $0xc0] sm:$0xff]
    %v153 = vld [vmem:[#allocation5 + $0xc8] sm:$0xff]
    %v154 = vld [vmem:[#allocation5 + $0xd0] sm:$0xff]
    %v155 = vld [vmem:[#allocation5 + $0xd8] sm:$0xff]
    %v156 = vld [vmem:[#allocation5 + $0xe0] sm:$0xff]
    %v157 = vld [vmem:[#allocation5 + $0xe8] sm:$0xff]
    %v158 = vld [vmem:[#allocation5 + $0xf0] sm:$0xff]
    %v159 = vld [vmem:[#allocation5 + $0xf8] sm:$0xff]
    %v160 = vld [vmem:[#allocation5 + $0x100] sm:$0xff]
    %v161 = vld [vmem:[#allocation5 + $0x108] sm:$0xff]
    %v162 = vld [vmem:[#allocation5 + $0x110] sm:$0xff]
    %v163 = vld [vmem:[#allocation5 + $0x118] sm:$0xff]
    %v164 = vld [vmem:[#allocation5 + $0x120] sm:$0xff]
    %v165 = vld [vmem:[#allocation5 + $0x128] sm:$0xff]
    %v166 = vld [vmem:[#allocation5 + $0x130] sm:$0xff]
    %v167 = vld [vmem:[#allocation5 + $0x138] sm:$0xff]
    %v168 = vld [vmem:[#allocation5 + $0x140] sm:$0xff]
    %v169 = vld [vmem:[#allocation5 + $0x148] sm:$0xff]
    %v170 = vld [vmem:[#allocation5 + $0x150] sm:$0xff]
    %v171 = vld [vmem:[#allocation5 + $0x158] sm:$0xff]
    %v172 = vld [vmem:[#allocation5 + $0x160] sm:$0xff]
    %v173 = vld [vmem:[#allocation5 + $0x168] sm:$0xff]
    %v174 = vld [vmem:[#allocation5 + $0x170] sm:$0xff]
    %v175 = vld [vmem:[#allocation5 + $0x178] sm:$0xff]
    %v176 = vld [vmem:[%s6] ss:$8 sm:$0x3]
    %v178 = vlaneseq
    %v179 = vshrl.u32 %v178, 7
    %v180 = vsub.s32 0, %v179
    %v181 = vrot.slane %v176, %v180
    %v182 = vlaneseq
    %v183 = vshrl.u32 %v182, 7
    %v184 = vsub.s32 1, %v183
    %v185 = vrot.slane %v176, %v184
    %v236 = vunpack.c.l.b16 %v128
    %v237 = vunpack.c.h.b16 %v128
    %v238 = vunpack.c.l.b16 %v129
    %v239 = vunpack.c.h.b16 %v129
    %v240 = vunpack.c.l.b16 %v130
    %v241 = vunpack.c.h.b16 %v130
    %v242 = vunpack.c.l.b16 %v131
    %v243 = vunpack.c.h.b16 %v131
    %v244 = vunpack.c.l.b16 %v132
    %v245 = vunpack.c.h.b16 %v132
    %v246 = vunpack.c.l.b16 %v133
    %v247 = vunpack.c.h.b16 %v133
    %v248 = vunpack.c.l.b16 %v134
    %v249 = vunpack.c.h.b16 %v134
    %v250 = vunpack.c.l.b16 %v135
    %v251 = vunpack.c.h.b16 %v135
    %v252 = vunpack.c.l.b16 %v136
    %v253 = vunpack.c.h.b16 %v136
    %v254 = vunpack.c.l.b16 %v137
    %v255 = vunpack.c.h.b16 %v137
    %v256 = vunpack.c.l.b16 %v138
    %v257 = vunpack.c.h.b16 %v138
    %v258 = vunpack.c.l.b16 %v139
    %v259 = vunpack.c.h.b16 %v139
    %v260 = vunpack.c.l.b16 %v140
    %v261 = vunpack.c.h.b16 %v140
    %v262 = vunpack.c.l.b16 %v141
    %v263 = vunpack.c.h.b16 %v141
    %v264 = vunpack.c.l.b16 %v142
    %v265 = vunpack.c.h.b16 %v142
    %v266 = vunpack.c.l.b16 %v143
    %v267 = vunpack.c.h.b16 %v143
    %v268 = vunpack.c.l.b16 %v144
    %v269 = vunpack.c.h.b16 %v144
    %v270 = vunpack.c.l.b16 %v145
    %v271 = vunpack.c.h.b16 %v145
    %v272 = vunpack.c.l.b16 %v146
    %v273 = vunpack.c.h.b16 %v146
    %v274 = vunpack.c.l.b16 %v147
    %v275 = vunpack.c.h.b16 %v147
    %v276 = vunpack.c.l.b16 %v148
    %v277 = vunpack.c.h.b16 %v148
    %v278 = vunpack.c.l.b16 %v149
    %v279 = vunpack.c.h.b16 %v149
    %v280 = vunpack.c.l.b16 %v150
    %v281 = vunpack.c.h.b16 %v150
    %v282 = vunpack.c.l.b16 %v151
    %v283 = vunpack.c.h.b16 %v151
    %v284 = vunpack.c.l.b16 %v152
    %v285 = vunpack.c.h.b16 %v152
    %v286 = vunpack.c.l.b16 %v153
    %v287 = vunpack.c.h.b16 %v153
    %v288 = vunpack.c.l.b16 %v154
    %v289 = vunpack.c.h.b16 %v154
    %v290 = vunpack.c.l.b16 %v155
    %v291 = vunpack.c.h.b16 %v155
    %v292 = vunpack.c.l.b16 %v156
    %v293 = vunpack.c.h.b16 %v156
    %v294 = vunpack.c.l.b16 %v157
    %v295 = vunpack.c.h.b16 %v157
    %v296 = vunpack.c.l.b16 %v158
    %v297 = vunpack.c.h.b16 %v158
    %v298 = vunpack.c.l.b16 %v159
    %v299 = vunpack.c.h.b16 %v159
    %v300 = vunpack.c.l.b16 %v160
    %v301 = vunpack.c.h.b16 %v160
    %v302 = vunpack.c.l.b16 %v161
    %v303 = vunpack.c.h.b16 %v161
    %v304 = vunpack.c.l.b16 %v162
    %v305 = vunpack.c.h.b16 %v162
    %v306 = vunpack.c.l.b16 %v163
    %v307 = vunpack.c.h.b16 %v163
    %v308 = vunpack.c.l.b16 %v164
    %v309 = vunpack.c.h.b16 %v164
    %v310 = vunpack.c.l.b16 %v165
    %v311 = vunpack.c.h.b16 %v165
    %v312 = vunpack.c.l.b16 %v166
    %v313 = vunpack.c.h.b16 %v166
    %v314 = vunpack.c.l.b16 %v167
    %v315 = vunpack.c.h.b16 %v167
    %v316 = vunpack.c.l.b16 %v168
    %v317 = vunpack.c.h.b16 %v168
    %v318 = vunpack.c.l.b16 %v169
    %v319 = vunpack.c.h.b16 %v169
    %v320 = vunpack.c.l.b16 %v170
    %v321 = vunpack.c.h.b16 %v170
    %v322 = vunpack.c.l.b16 %v171
    %v323 = vunpack.c.h.b16 %v171
    %v324 = vunpack.c.l.b16 %v172
    %v325 = vunpack.c.h.b16 %v172
    %v326 = vunpack.c.l.b16 %v173
    %v327 = vunpack.c.h.b16 %v173
    %v328 = vunpack.c.l.b16 %v174
    %v329 = vunpack.c.h.b16 %v174
    %v330 = vunpack.c.l.b16 %v175
    %v331 = vunpack.c.h.b16 %v175
    %v332 = vpack.c.b16 %v238, %v236
    %v333 = vpack.c.b16 %v239, %v237
    %v334 = vpack.c.b16 %v242, %v240
    %v335 = vpack.c.b16 %v243, %v241
    %v336 = vpack.c.b16 %v246, %v244
    %v337 = vpack.c.b16 %v247, %v245
    %v338 = vpack.c.b16 %v250, %v248
    %v339 = vpack.c.b16 %v251, %v249
    %v340 = vpack.c.b16 %v254, %v252
    %v341 = vpack.c.b16 %v255, %v253
    %v342 = vpack.c.b16 %v258, %v256
    %v343 = vpack.c.b16 %v259, %v257
    %v344 = vpack.c.b16 %v262, %v260
    %v345 = vpack.c.b16 %v263, %v261
    %v346 = vpack.c.b16 %v266, %v264
    %v347 = vpack.c.b16 %v267, %v265
    %v348 = vpack.c.b16 %v270, %v268
    %v349 = vpack.c.b16 %v271, %v269
    %v350 = vpack.c.b16 %v274, %v272
    %v351 = vpack.c.b16 %v275, %v273
    %v352 = vpack.c.b16 %v278, %v276
    %v353 = vpack.c.b16 %v279, %v277
    %v354 = vpack.c.b16 %v282, %v280
    %v355 = vpack.c.b16 %v283, %v281
    %v356 = vpack.c.b16 %v286, %v284
    %v357 = vpack.c.b16 %v287, %v285
    %v358 = vpack.c.b16 %v290, %v288
    %v359 = vpack.c.b16 %v291, %v289
    %v360 = vpack.c.b16 %v294, %v292
    %v361 = vpack.c.b16 %v295, %v293
    %v362 = vpack.c.b16 %v298, %v296
    %v363 = vpack.c.b16 %v299, %v297
    %v364 = vpack.c.b16 %v302, %v300
    %v365 = vpack.c.b16 %v303, %v301
    %v366 = vpack.c.b16 %v306, %v304
    %v367 = vpack.c.b16 %v307, %v305
    %v368 = vpack.c.b16 %v310, %v308
    %v369 = vpack.c.b16 %v311, %v309
    %v370 = vpack.c.b16 %v314, %v312
    %v371 = vpack.c.b16 %v315, %v313
    %v372 = vpack.c.b16 %v318, %v316
    %v373 = vpack.c.b16 %v319, %v317
    %v374 = vpack.c.b16 %v322, %v320
    %v375 = vpack.c.b16 %v323, %v321
    %v376 = vpack.c.b16 %v326, %v324
    %v377 = vpack.c.b16 %v327, %v325
    %v378 = vpack.c.b16 %v330, %v328
    %v379 = vpack.c.b16 %v331, %v329
    %428 = vmatprep.subr.bf16.mxu0 %v333
    %429 = vmatpush1.bf16.msra.mxu0 %v332
    %430 = vmatprep.subr.bf16.mxu0 %v335
    %431 = vmatpush1.bf16.msra.mxu0 %v334
    %432 = vmatprep.subr.bf16.mxu0 %v337
    %433 = vmatpush1.bf16.msra.mxu0 %v336
    %434 = vmatprep.subr.bf16.mxu0 %v339
    %435 = vmatpush1.bf16.msra.mxu0 %v338
    %436 = vmatprep.subr.bf16.mxu0 %v341
    %437 = vmatpush1.bf16.msra.mxu0 %v340
    %438 = vmatprep.subr.bf16.mxu0 %v343
    %439 = vmatpush1.bf16.msra.mxu0 %v342
    %440 = vmatprep.subr.bf16.mxu0 %v345
    %441 = vmatpush1.bf16.msra.mxu0 %v344
    %442 = vmatprep.subr.bf16.mxu0 %v347
    %443 = vmatpush1.bf16.msra.mxu0 %v346
    %444 = vmatprep.subr.bf16.mxu0 %v349
    %445 = vmatpush1.bf16.msra.mxu0 %v348
    %446 = vmatprep.subr.bf16.mxu0 %v351
    %447 = vmatpush1.bf16.msra.mxu0 %v350
    %448 = vmatprep.subr.bf16.mxu0 %v353
    %449 = vmatpush1.bf16.msra.mxu0 %v352
    %450 = vmatprep.subr.bf16.mxu0 %v355
    %451 = vmatpush1.bf16.msra.mxu0 %v354
    %452 = vmatprep.subr.bf16.mxu0 %v357
    %453 = vmatpush1.bf16.msra.mxu0 %v356
    %454 = vmatprep.subr.bf16.mxu0 %v359
    %455 = vmatpush1.bf16.msra.mxu0 %v358
    %456 = vmatprep.subr.bf16.mxu0 %v361
    %457 = vmatpush1.bf16.msra.mxu0 %v360
    %458 = vmatprep.subr.bf16.mxu0 %v363
    %459 = vmatpush1.bf16.msra.mxu0 %v362
    %460 = vmatprep.mubr.bf16.mxu0 %v126
    %461 = vmatmul.mubr.bf16.gmra.mrb[0].mxu0 %v125
    %v462 = vpop.f32.mrb[0].mxu0
    %v463 = vadd.f32 %v181, %v462
    %v464 = vpop.f32.mrb[0].mxu0
    %v465 = vadd.f32 %v185, %v464
    %v466 = vpop.f32.mrb[0].mxu0
    %v467 = vadd.f32 %v181, %v466
    %v468 = vpop.f32.mrb[0].mxu0
    %v469 = vadd.f32 %v185, %v468
    %470 = vdwg.mxu0
    %471 = vmatprep.subr.bf16.mxu0 %v365
    %472 = vmatpush1.bf16.msra.mxu0 %v364
    %473 = vmatprep.subr.bf16.mxu0 %v367
    %474 = vmatpush1.bf16.msra.mxu0 %v366
    %475 = vmatprep.subr.bf16.mxu0 %v369
    %476 = vmatpush1.bf16.msra.mxu0 %v368
    %477 = vmatprep.subr.bf16.mxu0 %v371
    %478 = vmatpush1.bf16.msra.mxu0 %v370
    %479 = vmatprep.subr.bf16.mxu0 %v373
    %480 = vmatpush1.bf16.msra.mxu0 %v372
    %481 = vmatprep.subr.bf16.mxu0 %v375
    %482 = vmatpush1.bf16.msra.mxu0 %v374
    %483 = vmatprep.subr.bf16.mxu0 %v377
    %484 = vmatpush1.bf16.msra.mxu0 %v376
    %485 = vmatprep.subr.bf16.mxu0 %v379
    %486 = vmatpush1.bf16.msra.mxu0 %v378
    %487 = vmatprep.subr.bf16.mxu0 0
    %488 = vmatpush1.bf16.msra.mxu0 0
    %489 = vmatprep.subr.bf16.mxu0 0
    %490 = vmatpush1.bf16.msra.mxu0 0
    %491 = vmatprep.subr.bf16.mxu0 0
    %492 = vmatpush1.bf16.msra.mxu0 0
    %493 = vmatprep.subr.bf16.mxu0 0
    %494 = vmatpush1.bf16.msra.mxu0 0
    %495 = vmatprep.subr.bf16.mxu0 0
    %496 = vmatpush1.bf16.msra.mxu0 0
    %497 = vmatprep.subr.bf16.mxu0 0
    %498 = vmatpush1.bf16.msra.mxu0 0
    %499 = vmatprep.subr.bf16.mxu0 0
    %500 = vmatpush1.bf16.msra.mxu0 0
    %501 = vmatprep.subr.bf16.mxu0 0
    %502 = vmatpush1.bf16.msra.mxu0 0
    %503 = vmatprep.mubr.bf16.mxu0 0
    %504 = vmatmul.mubr.bf16.gmra.mrb[0].mxu0 %v127
    %v505 = vpop.f32.mrb[0].mxu0
    %v506 = vadd.f32 %v463, %v505
    %v507 = vpop.f32.mrb[0].mxu0
    %v508 = vadd.f32 %v465, %v507
    %v509 = vpop.f32.mrb[0].mxu0
    %v510 = vadd.f32 %v467, %v509
    %v511 = vpop.f32.mrb[0].mxu0
    %v512 = vadd.f32 %v469, %v511
    %513 = vdwg.mxu0
    %v514 = vtanh.pop %v506
    %v515 = vtanh.pop %v508
    %v516 = vtanh.pop %v510
    %v517 = vtanh.pop %v512
    %v518 = vpack.c.bf16 %v516, %v514
    %v519 = vpack.c.bf16 %v517, %v515
    %v520 = vld [vmem:[#allocation7] sm:$0xff]
    %v521 = vld [vmem:[#allocation7 + $0x8] sm:$0xff]
    %v522 = vld [vmem:[#allocation7 + $0x10] sm:$0xff]
    %v523 = vld [vmem:[#allocation7 + $0x18] sm:$0xff]
    %v524 = vld [vmem:[#allocation7 + $0x20] sm:$0xff]
    %v525 = vld [vmem:[#allocation7 + $0x28] sm:$0xff]
    %v526 = vld [vmem:[#allocation7 + $0x30] sm:$0xff]
    %v527 = vld [vmem:[#allocation7 + $0x38] sm:$0xff]
    %v528 = vld [vmem:[#allocation7 + $0x40] sm:$0xff]
    %v529 = vld [vmem:[#allocation7 + $0x48] sm:$0xff]
    %v530 = vld [vmem:[#allocation7 + $0x50] sm:$0xff]
    %v531 = vld [vmem:[#allocation7 + $0x58] sm:$0xff]
    %v532 = vld [vmem:[#allocation7 + $0x60] sm:$0xff]
    %v533 = vld [vmem:[#allocation7 + $0x68] sm:$0xff]
    %v534 = vld [vmem:[#allocation7 + $0x70] sm:$0xff]
    %v535 = vld [vmem:[#allocation7 + $0x78] sm:$0xff]
    %v536 = vld [vmem:[#allocation7 + $0x80] sm:$0xff]
    %v537 = vld [vmem:[#allocation7 + $0x88] sm:$0xff]
    %v538 = vld [vmem:[#allocation7 + $0x90] sm:$0xff]
    %v539 = vld [vmem:[#allocation7 + $0x98] sm:$0xff]
    %v540 = vld [vmem:[#allocation7 + $0xa0] sm:$0xff]
    %v541 = vld [vmem:[#allocation7 + $0xa8] sm:$0xff]
    %v542 = vld [vmem:[#allocation7 + $0xb0] sm:$0xff]
    %v543 = vld [vmem:[#allocation7 + $0xb8] sm:$0xff]
    %v544 = vld [vmem:[#allocation7 + $0xc0] sm:$0xff]
    %v545 = vld [vmem:[#allocation7 + $0xc8] sm:$0xff]
    %v546 = vld [vmem:[#allocation7 + $0xd0] sm:$0xff]
    %v547 = vld [vmem:[#allocation7 + $0xd8] sm:$0xff]
    %v548 = vld [vmem:[#allocation7 + $0xe0] sm:$0xff]
    %v549 = vld [vmem:[#allocation7 + $0xe8] sm:$0xff]
    %v550 = vld [vmem:[#allocation7 + $0xf0] sm:$0xff]
    %v551 = vld [vmem:[#allocation7 + $0xf8] sm:$0xff]
    %v584 = vunpack.c.l.b16 %v520
    %v585 = vunpack.c.h.b16 %v520
    %v586 = vunpack.c.l.b16 %v521
    %v587 = vunpack.c.h.b16 %v521
    %v588 = vunpack.c.l.b16 %v522
    %v589 = vunpack.c.h.b16 %v522
    %v590 = vunpack.c.l.b16 %v523
    %v591 = vunpack.c.h.b16 %v523
    %v592 = vunpack.c.l.b16 %v524
    %v593 = vunpack.c.h.b16 %v524
    %v594 = vunpack.c.l.b16 %v525
    %v595 = vunpack.c.h.b16 %v525
    %v596 = vunpack.c.l.b16 %v526
    %v597 = vunpack.c.h.b16 %v526
    %v598 = vunpack.c.l.b16 %v527
    %v599 = vunpack.c.h.b16 %v527
    %v600 = vunpack.c.l.b16 %v528
    %v601 = vunpack.c.h.b16 %v528
    %v602 = vunpack.c.l.b16 %v529
    %v603 = vunpack.c.h.b16 %v529
    %v604 = vunpack.c.l.b16 %v530
    %v605 = vunpack.c.h.b16 %v530
    %v606 = vunpack.c.l.b16 %v531
    %v607 = vunpack.c.h.b16 %v531
    %v608 = vunpack.c.l.b16 %v532
    %v609 = vunpack.c.h.b16 %v532
    %v610 = vunpack.c.l.b16 %v533
    %v611 = vunpack.c.h.b16 %v533
    %v612 = vunpack.c.l.b16 %v534
    %v613 = vunpack.c.h.b16 %v534
    %v614 = vunpack.c.l.b16 %v535
    %v615 = vunpack.c.h.b16 %v535
    %v616 = vunpack.c.l.b16 %v536
    %v617 = vunpack.c.h.b16 %v536
    %v618 = vunpack.c.l.b16 %v537
    %v619 = vunpack.c.h.b16 %v537
    %v620 = vunpack.c.l.b16 %v538
    %v621 = vunpack.c.h.b16 %v538
    %v622 = vunpack.c.l.b16 %v539
    %v623 = vunpack.c.h.b16 %v539
    %v624 = vunpack.c.l.b16 %v540
    %v625 = vunpack.c.h.b16 %v540
    %v626 = vunpack.c.l.b16 %v541
    %v627 = vunpack.c.h.b16 %v541
    %v628 = vunpack.c.l.b16 %v542
    %v629 = vunpack.c.h.b16 %v542
    %v630 = vunpack.c.l.b16 %v543
    %v631 = vunpack.c.h.b16 %v543
    %v632 = vunpack.c.l.b16 %v544
    %v633 = vunpack.c.h.b16 %v544
    %v634 = vunpack.c.l.b16 %v545
    %v635 = vunpack.c.h.b16 %v545
    %v636 = vunpack.c.l.b16 %v546
    %v637 = vunpack.c.h.b16 %v546
    %v638 = vunpack.c.l.b16 %v547
    %v639 = vunpack.c.h.b16 %v547
    %v640 = vunpack.c.l.b16 %v548
    %v641 = vunpack.c.h.b16 %v548
    %v642 = vunpack.c.l.b16 %v549
    %v643 = vunpack.c.h.b16 %v549
    %v644 = vunpack.c.l.b16 %v550
    %v645 = vunpack.c.h.b16 %v550
    %v646 = vunpack.c.l.b16 %v551
    %v647 = vunpack.c.h.b16 %v551
    %v648 = vpack.c.b16 %v586, %v584
    %v649 = vpack.c.b16 %v587, %v585
    %v650 = vpack.c.b16 %v590, %v588
    %v651 = vpack.c.b16 %v591, %v589
    %v652 = vpack.c.b16 %v594, %v592
    %v653 = vpack.c.b16 %v595, %v593
    %v654 = vpack.c.b16 %v598, %v596
    %v655 = vpack.c.b16 %v599, %v597
    %v656 = vpack.c.b16 %v602, %v600
    %v657 = vpack.c.b16 %v603, %v601
    %v658 = vpack.c.b16 %v606, %v604
    %v659 = vpack.c.b16 %v607, %v605
    %v660 = vpack.c.b16 %v610, %v608
    %v661 = vpack.c.b16 %v611, %v609
    %v662 = vpack.c.b16 %v614, %v612
    %v663 = vpack.c.b16 %v615, %v613
    %v664 = vpack.c.b16 %v618, %v616
    %v665 = vpack.c.b16 %v619, %v617
    %v666 = vpack.c.b16 %v622, %v620
    %v667 = vpack.c.b16 %v623, %v621
    %v668 = vpack.c.b16 %v626, %v624
    %v669 = vpack.c.b16 %v627, %v625
    %v670 = vpack.c.b16 %v630, %v628
    %v671 = vpack.c.b16 %v631, %v629
    %v672 = vpack.c.b16 %v634, %v632
    %v673 = vpack.c.b16 %v635, %v633
    %v674 = vpack.c.b16 %v638, %v636
    %v675 = vpack.c.b16 %v639, %v637
    %v676 = vpack.c.b16 %v642, %v640
    %v677 = vpack.c.b16 %v643, %v641
    %v678 = vpack.c.b16 %v646, %v644
    %v679 = vpack.c.b16 %v647, %v645
    %712 = vmatprep.subr.bf16.mxu0 %v649
    %713 = vmatpush1.bf16.msra.mxu0 %v648
    %714 = vmatprep.subr.bf16.mxu0 %v651
    %715 = vmatpush1.bf16.msra.mxu0 %v650
    %716 = vmatprep.subr.bf16.mxu0 %v653
    %717 = vmatpush1.bf16.msra.mxu0 %v652
    %718 = vmatprep.subr.bf16.mxu0 %v655
    %719 = vmatpush1.bf16.msra.mxu0 %v654
    %720 = vmatprep.subr.bf16.mxu0 %v657
    %721 = vmatpush1.bf16.msra.mxu0 %v656
    %722 = vmatprep.subr.bf16.mxu0 %v659
    %723 = vmatpush1.bf16.msra.mxu0 %v658
    %724 = vmatprep.subr.bf16.mxu0 %v661
    %725 = vmatpush1.bf16.msra.mxu0 %v660
    %726 = vmatprep.subr.bf16.mxu0 %v663
    %727 = vmatpush1.bf16.msra.mxu0 %v662
    %728 = vmatprep.subr.bf16.mxu0 %v665
    %729 = vmatpush1.bf16.msra.mxu0 %v664
    %730 = vmatprep.subr.bf16.mxu0 %v667
    %731 = vmatpush1.bf16.msra.mxu0 %v666
    %732 = vmatprep.subr.bf16.mxu0 %v669
    %733 = vmatpush1.bf16.msra.mxu0 %v668
    %734 = vmatprep.subr.bf16.mxu0 %v671
    %735 = vmatpush1.bf16.msra.mxu0 %v670
    %736 = vmatprep.subr.bf16.mxu0 %v673
    %737 = vmatpush1.bf16.msra.mxu0 %v672
    %738 = vmatprep.subr.bf16.mxu0 %v675
    %739 = vmatpush1.bf16.msra.mxu0 %v674
    %740 = vmatprep.subr.bf16.mxu0 %v677
    %741 = vmatpush1.bf16.msra.mxu0 %v676
    %742 = vmatprep.subr.bf16.mxu0 %v679
    %743 = vmatpush1.bf16.msra.mxu0 %v678
    %744 = vmatprep.mubr.bf16.mxu0 %v519
    %745 = vmatmul.mubr.bf16.gmra.mrb[0].mxu0 %v518
    %v746 = vpop.f32.mrb[0].mxu0
    %v747 = vadd.f32 0.0, %v746
    %v748 = vpop.f32.mrb[0].mxu0
    %v749 = vadd.f32 0.0, %v748
    %v750 = vpop.f32.mrb[0].mxu0
    %v751 = vadd.f32 0.0, %v750
    %v752 = vpop.f32.mrb[0].mxu0
    %v753 = vadd.f32 0.0, %v752
    %754 = vdwg.mxu0
    %s755 = scalar_lea.vmem %s6, 1
    %v756 = vld [vmem:[%s755] ss:$8 sm:$0x3]
    %s757 = scalar_lea.vmem %s6, 2
    %v758 = vld [vmem:[%s757] ss:$8 sm:$0x3]
    %v759 = vadd.f32 %v747, %v751
    %v760 = vrot.slane %v759, 4
    %v761 = vadd.f32 %v759, %v760
    %v762 = vrot.slane %v761, 2
    %v763 = vadd.f32 %v761, %v762
    %v764 = vrot.slane %v763, 1
    %v765 = vadd.f32 %v763, %v764
    %v766 = vadd.f32 %v749, %v753
    %v767 = vrot.slane %v766, 4
    %v768 = vadd.f32 %v766, %v767
    %v769 = vrot.slane %v768, 2
    %v770 = vadd.f32 %v768, %v769
    %v771 = vrot.slane %v770, 1
    %v772 = vadd.f32 %v770, %v771
    %v773 = vmul.f32 %v765, 0.0625
    %v774 = vmul.f32 %v772, 0.0625
    %v775 = vmul.f32 %v747, %v747
    %v776 = vmul.f32 %v749, %v749
    %v777 = vmul.f32 %v751, %v751
    %v778 = vmul.f32 %v753, %v753
    %v779 = vadd.f32 %v775, %v777
    %v780 = vrot.slane %v779, 4
    %v781 = vadd.f32 %v779, %v780
    %v782 = vrot.slane %v781, 2
    %v783 = vadd.f32 %v781, %v782
    %v784 = vrot.slane %v783, 1
    %v785 = vadd.f32 %v783, %v784
    %v786 = vadd.f32 %v776, %v778
    %v787 = vrot.slane %v786, 4
    %v788 = vadd.f32 %v786, %v787
    %v789 = vrot.slane %v788, 2
    %v790 = vadd.f32 %v788, %v789
    %v791 = vrot.slane %v790, 1
    %v792 = vadd.f32 %v790, %v791
    %v793 = vmul.f32 %v785, 0.0625
    %v794 = vmul.f32 %v792, 0.0625
    %v795 = vmul.f32 %v773, %v773
    %v796 = vmul.f32 %v774, %v774
    %v797 = vsub.f32 %v793, %v795
    %v798 = vsub.f32 %v794, %v796
    %v799 = vmax.f32 %v797, 0.0
    %v800 = vmax.f32 %v798, 0.0
    %v801 = vadd.f32 %v799, 1e-05
    %v802 = vadd.f32 %v800, 1e-05
    %v803 = vrsqrt.pop %v801
    %v804 = vrsqrt.pop %v802
    %v807 = vcombine.low %v803, %v804
    %v809 = vunpack.c.l.s4 1966171168
    %v810 = vunpack.c.0.s8 %v809
    %v811 = vlaneseq
    %v812 = vshrl.u32 %v811, 7
    %v813 = vsub.s32 %v810, %v812
    %v814 = vrot.slane %v807, %v813
    %v816 = vunpack.c.l.s4 1966171168
    %v817 = vunpack.c.0.s8 %v816
    %v818 = vlaneseq
    %v819 = vshrl.u32 %v818, 7
    %v820 = vsub.s32 %v817, %v819
    %v821 = vrot.slane %v814, %v820
    %v823 = vmul.f32 %v756, %v821
    %v825 = vlaneseq
    %v826 = vshrl.u32 %v825, 7
    %v827 = vsub.s32 0, %v826
    %v828 = vrot.slane %v823, %v827
    %v829 = vlaneseq
    %v830 = vshrl.u32 %v829, 7
    %v831 = vsub.s32 1, %v830
    %v832 = vrot.slane %v823, %v831
    %v835 = vmul.f32 %v773, %v828
    %v836 = vmul.f32 %v774, %v832
    %v839 = vcombine.low %v835, %v836
    %v841 = vunpack.c.l.s4 1966171168
    %v842 = vunpack.c.0.s8 %v841
    %v843 = vlaneseq
    %v844 = vshrl.u32 %v843, 7
    %v845 = vsub.s32 %v842, %v844
    %v846 = vrot.slane %v839, %v845
    %v848 = vunpack.c.l.s4 1966171168
    %v849 = vunpack.c.0.s8 %v848
    %v850 = vlaneseq
    %v851 = vshrl.u32 %v850, 7
    %v852 = vsub.s32 %v849, %v851
    %v853 = vrot.slane %v846, %v852
    %v855 = vsub.f32 %v758, %v853
    %v856 = vmul.f32 %v747, %v828
    %v857 = vmul.f32 %v749, %v832
    %v858 = vmul.f32 %v751, %v828
    %v859 = vmul.f32 %v753, %v832
    %v861 = vlaneseq
    %v862 = vshrl.u32 %v861, 7
    %v863 = vsub.s32 0, %v862
    %v864 = vrot.slane %v855, %v863
    %v865 = vlaneseq
    %v866 = vshrl.u32 %v865, 7
    %v867 = vsub.s32 1, %v866
    %v868 = vrot.slane %v855, %v867
    %v871 = vadd.f32 %v856, %v864
    %v872 = vadd.f32 %v857, %v868
    %v873 = vadd.f32 %v858, %v864
    %v874 = vadd.f32 %v859, %v868
    %v875 = vtanh.pop %v871
    %v876 = vtanh.pop %v872
    %v877 = vtanh.pop %v873
    %v878 = vtanh.pop %v874
    %v879 = vpack.c.bf16 %v877, %v875
    %v880 = vpack.c.bf16 %v878, %v876
    %v881 = vld [vmem:[#allocation8] sm:$0xff]
    %v882 = vld [vmem:[#allocation8 + $0x8] sm:$0xff]
    %v883 = vld [vmem:[#allocation8 + $0x10] sm:$0xff]
    %v884 = vld [vmem:[#allocation8 + $0x18] sm:$0xff]
    %v885 = vld [vmem:[#allocation8 + $0x20] sm:$0xff]
    %v886 = vld [vmem:[#allocation8 + $0x28] sm:$0xff]
    %v887 = vld [vmem:[#allocation8 + $0x30] sm:$0xff]
    %v888 = vld [vmem:[#allocation8 + $0x38] sm:$0xff]
    %v889 = vld [vmem:[#allocation8 + $0x40] sm:$0xff]
    %v890 = vld [vmem:[#allocation8 + $0x48] sm:$0xff]
    %v891 = vld [vmem:[#allocation8 + $0x50] sm:$0xff]
    %v892 = vld [vmem:[#allocation8 + $0x58] sm:$0xff]
    %v893 = vld [vmem:[#allocation8 + $0x60] sm:$0xff]
    %v894 = vld [vmem:[#allocation8 + $0x68] sm:$0xff]
    %v895 = vld [vmem:[#allocation8 + $0x70] sm:$0xff]
    %v896 = vld [vmem:[#allocation8 + $0x78] sm:$0xff]
    %v897 = vld [vmem:[#allocation8 + $0x80] sm:$0xff]
    %v898 = vld [vmem:[#allocation8 + $0x88] sm:$0xff]
    %v899 = vld [vmem:[#allocation8 + $0x90] sm:$0xff]
    %v900 = vld [vmem:[#allocation8 + $0x98] sm:$0xff]
    %v901 = vld [vmem:[#allocation8 + $0xa0] sm:$0xff]
    %v902 = vld [vmem:[#allocation8 + $0xa8] sm:$0xff]
    %v903 = vld [vmem:[#allocation8 + $0xb0] sm:$0xff]
    %v904 = vld [vmem:[#allocation8 + $0xb8] sm:$0xff]
    %v905 = vld [vmem:[#allocation8 + $0xc0] sm:$0xff]
    %v906 = vld [vmem:[#allocation8 + $0xc8] sm:$0xff]
    %v907 = vld [vmem:[#allocation8 + $0xd0] sm:$0xff]
    %v908 = vld [vmem:[#allocation8 + $0xd8] sm:$0xff]
    %v909 = vld [vmem:[#allocation8 + $0xe0] sm:$0xff]
    %v910 = vld [vmem:[#allocation8 + $0xe8] sm:$0xff]
    %v911 = vld [vmem:[#allocation8 + $0xf0] sm:$0xff]
    %v912 = vld [vmem:[#allocation8 + $0xf8] sm:$0xff]
    %v945 = vunpack.c.l.b16 %v881
    %v946 = vunpack.c.h.b16 %v881
    %v947 = vunpack.c.l.b16 %v882
    %v948 = vunpack.c.h.b16 %v882
    %v949 = vunpack.c.l.b16 %v883
    %v950 = vunpack.c.h.b16 %v883
    %v951 = vunpack.c.l.b16 %v884
    %v952 = vunpack.c.h.b16 %v884
    %v953 = vunpack.c.l.b16 %v885
    %v954 = vunpack.c.h.b16 %v885
    %v955 = vunpack.c.l.b16 %v886
    %v956 = vunpack.c.h.b16 %v886
    %v957 = vunpack.c.l.b16 %v887
    %v958 = vunpack.c.h.b16 %v887
    %v959 = vunpack.c.l.b16 %v888
    %v960 = vunpack.c.h.b16 %v888
    %v961 = vunpack.c.l.b16 %v889
    %v962 = vunpack.c.h.b16 %v889
    %v963 = vunpack.c.l.b16 %v890
    %v964 = vunpack.c.h.b16 %v890
    %v965 = vunpack.c.l.b16 %v891
    %v966 = vunpack.c.h.b16 %v891
    %v967 = vunpack.c.l.b16 %v892
    %v968 = vunpack.c.h.b16 %v892
    %v969 = vunpack.c.l.b16 %v893
    %v970 = vunpack.c.h.b16 %v893
    %v971 = vunpack.c.l.b16 %v894
    %v972 = vunpack.c.h.b16 %v894
    %v973 = vunpack.c.l.b16 %v895
    %v974 = vunpack.c.h.b16 %v895
    %v975 = vunpack.c.l.b16 %v896
    %v976 = vunpack.c.h.b16 %v896
    %v977 = vunpack.c.l.b16 %v897
    %v978 = vunpack.c.h.b16 %v897
    %v979 = vunpack.c.l.b16 %v898
    %v980 = vunpack.c.h.b16 %v898
    %v981 = vunpack.c.l.b16 %v899
    %v982 = vunpack.c.h.b16 %v899
    %v983 = vunpack.c.l.b16 %v900
    %v984 = vunpack.c.h.b16 %v900
    %v985 = vunpack.c.l.b16 %v901
    %v986 = vunpack.c.h.b16 %v901
    %v987 = vunpack.c.l.b16 %v902
    %v988 = vunpack.c.h.b16 %v902
    %v989 = vunpack.c.l.b16 %v903
    %v990 = vunpack.c.h.b16 %v903
    %v991 = vunpack.c.l.b16 %v904
    %v992 = vunpack.c.h.b16 %v904
    %v993 = vunpack.c.l.b16 %v905
    %v994 = vunpack.c.h.b16 %v905
    %v995 = vunpack.c.l.b16 %v906
    %v996 = vunpack.c.h.b16 %v906
    %v997 = vunpack.c.l.b16 %v907
    %v998 = vunpack.c.h.b16 %v907
    %v999 = vunpack.c.l.b16 %v908
    %v1000 = vunpack.c.h.b16 %v908
    %v1001 = vunpack.c.l.b16 %v909
    %v1002 = vunpack.c.h.b16 %v909
    %v1003 = vunpack.c.l.b16 %v910
    %v1004 = vunpack.c.h.b16 %v910
    %v1005 = vunpack.c.l.b16 %v911
    %v1006 = vunpack.c.h.b16 %v911
    %v1007 = vunpack.c.l.b16 %v912
    %v1008 = vunpack.c.h.b16 %v912
    %v1009 = vpack.c.b16 %v947, %v945
    %v1010 = vpack.c.b16 %v948, %v946
    %v1011 = vpack.c.b16 %v951, %v949
    %v1012 = vpack.c.b16 %v952, %v950
    %v1013 = vpack.c.b16 %v955, %v953
    %v1014 = vpack.c.b16 %v956, %v954
    %v1015 = vpack.c.b16 %v959, %v957
    %v1016 = vpack.c.b16 %v960, %v958
    %v1017 = vpack.c.b16 %v963, %v961
    %v1018 = vpack.c.b16 %v964, %v962
    %v1019 = vpack.c.b16 %v967, %v965
    %v1020 = vpack.c.b16 %v968, %v966
    %v1021 = vpack.c.b16 %v971, %v969
    %v1022 = vpack.c.b16 %v972, %v970
    %v1023 = vpack.c.b16 %v975, %v973
    %v1024 = vpack.c.b16 %v976, %v974
    %v1025 = vpack.c.b16 %v979, %v977
    %v1026 = vpack.c.b16 %v980, %v978
    %v1027 = vpack.c.b16 %v983, %v981
    %v1028 = vpack.c.b16 %v984, %v982
    %v1029 = vpack.c.b16 %v987, %v985
    %v1030 = vpack.c.b16 %v988, %v986
    %v1031 = vpack.c.b16 %v991, %v989
    %v1032 = vpack.c.b16 %v992, %v990
    %v1033 = vpack.c.b16 %v995, %v993
    %v1034 = vpack.c.b16 %v996, %v994
    %v1035 = vpack.c.b16 %v999, %v997
    %v1036 = vpack.c.b16 %v1000, %v998
    %v1037 = vpack.c.b16 %v1003, %v1001
    %v1038 = vpack.c.b16 %v1004, %v1002
    %v1039 = vpack.c.b16 %v1007, %v1005
    %v1040 = vpack.c.b16 %v1008, %v1006
    %1073 = vmatprep.subr.bf16.mxu0 %v1010
    %1074 = vmatpush1.bf16.msra.mxu0 %v1009
    %1075 = vmatprep.subr.bf16.mxu0 %v1012
    %1076 = vmatpush1.bf16.msra.mxu0 %v1011
    %1077 = vmatprep.subr.bf16.mxu0 %v1014
    %1078 = vmatpush1.bf16.msra.mxu0 %v1013
    %1079 = vmatprep.subr.bf16.mxu0 %v1016
    %1080 = vmatpush1.bf16.msra.mxu0 %v1015
    %1081 = vmatprep.subr.bf16.mxu0 %v1018
    %1082 = vmatpush1.bf16.msra.mxu0 %v1017
    %1083 = vmatprep.subr.bf16.mxu0 %v1020
    %1084 = vmatpush1.bf16.msra.mxu0 %v1019
    %1085 = vmatprep.subr.bf16.mxu0 %v1022
    %1086 = vmatpush1.bf16.msra.mxu0 %v1021
    %1087 = vmatprep.subr.bf16.mxu0 %v1024
    %1088 = vmatpush1.bf16.msra.mxu0 %v1023
    %1089 = vmatprep.subr.bf16.mxu0 %v1026
    %1090 = vmatpush1.bf16.msra.mxu0 %v1025
    %1091 = vmatprep.subr.bf16.mxu0 %v1028
    %1092 = vmatpush1.bf16.msra.mxu0 %v1027
    %1093 = vmatprep.subr.bf16.mxu0 %v1030
    %1094 = vmatpush1.bf16.msra.mxu0 %v1029
    %1095 = vmatprep.subr.bf16.mxu0 %v1032
    %1096 = vmatpush1.bf16.msra.mxu0 %v1031
    %1097 = vmatprep.subr.bf16.mxu0 %v1034
    %1098 = vmatpush1.bf16.msra.mxu0 %v1033
    %1099 = vmatprep.subr.bf16.mxu0 %v1036
    %1100 = vmatpush1.bf16.msra.mxu0 %v1035
    %1101 = vmatprep.subr.bf16.mxu0 %v1038
    %1102 = vmatpush1.bf16.msra.mxu0 %v1037
    %1103 = vmatprep.subr.bf16.mxu0 %v1040
    %1104 = vmatpush1.bf16.msra.mxu0 %v1039
    %1105 = vmatprep.mubr.bf16.mxu0 %v880
    %1106 = vmatmul.mubr.bf16.gmra.mrb[0].mxu0 %v879
    %v1107 = vpop.f32.mrb[0].mxu0
    %v1108 = vadd.f32 0.0, %v1107
    %v1109 = vpop.f32.mrb[0].mxu0
    %v1110 = vadd.f32 0.0, %v1109
    %v1111 = vpop.f32.mrb[0].mxu0
    %v1112 = vadd.f32 0.0, %v1111
    %v1113 = vpop.f32.mrb[0].mxu0
    %v1114 = vadd.f32 0.0, %v1113
    %1115 = vdwg.mxu0
    %s1116 = scalar_lea.vmem %s6, 3
    %v1117 = vld [vmem:[%s1116] ss:$8 sm:$0x3]
    %s1118 = scalar_lea.vmem %s6, 4
    %v1119 = vld [vmem:[%s1118] ss:$8 sm:$0x3]
    %v1120 = vadd.f32 %v1108, %v1112
    %v1121 = vrot.slane %v1120, 4
    %v1122 = vadd.f32 %v1120, %v1121
    %v1123 = vrot.slane %v1122, 2
    %v1124 = vadd.f32 %v1122, %v1123
    %v1125 = vrot.slane %v1124, 1
    %v1126 = vadd.f32 %v1124, %v1125
    %v1127 = vadd.f32 %v1110, %v1114
    %v1128 = vrot.slane %v1127, 4
    %v1129 = vadd.f32 %v1127, %v1128
    %v1130 = vrot.slane %v1129, 2
    %v1131 = vadd.f32 %v1129, %v1130
    %v1132 = vrot.slane %v1131, 1
    %v1133 = vadd.f32 %v1131, %v1132
    %v1134 = vmul.f32 %v1126, 0.0625
    %v1135 = vmul.f32 %v1133, 0.0625
    %v1136 = vmul.f32 %v1108, %v1108
    %v1137 = vmul.f32 %v1110, %v1110
    %v1138 = vmul.f32 %v1112, %v1112
    %v1139 = vmul.f32 %v1114, %v1114
    %v1140 = vadd.f32 %v1136, %v1138
    %v1141 = vrot.slane %v1140, 4
    %v1142 = vadd.f32 %v1140, %v1141
    %v1143 = vrot.slane %v1142, 2
    %v1144 = vadd.f32 %v1142, %v1143
    %v1145 = vrot.slane %v1144, 1
    %v1146 = vadd.f32 %v1144, %v1145
    %v1147 = vadd.f32 %v1137, %v1139
    %v1148 = vrot.slane %v1147, 4
    %v1149 = vadd.f32 %v1147, %v1148
    %v1150 = vrot.slane %v1149, 2
    %v1151 = vadd.f32 %v1149, %v1150
    %v1152 = vrot.slane %v1151, 1
    %v1153 = vadd.f32 %v1151, %v1152
    %v1154 = vmul.f32 %v1146, 0.0625
    %v1155 = vmul.f32 %v1153, 0.0625
    %v1156 = vmul.f32 %v1134, %v1134
    %v1157 = vmul.f32 %v1135, %v1135
    %v1158 = vsub.f32 %v1154, %v1156
    %v1159 = vsub.f32 %v1155, %v1157
    %v1160 = vmax.f32 %v1158, 0.0
    %v1161 = vmax.f32 %v1159, 0.0
    %v1162 = vadd.f32 %v1160, 1e-05
    %v1163 = vadd.f32 %v1161, 1e-05
    %v1164 = vrsqrt.pop %v1162
    %v1165 = vrsqrt.pop %v1163
    %v1168 = vcombine.low %v1164, %v1165
    %v1170 = vunpack.c.l.s4 1966171168
    %v1171 = vunpack.c.0.s8 %v1170
    %v1172 = vlaneseq
    %v1173 = vshrl.u32 %v1172, 7
    %v1174 = vsub.s32 %v1171, %v1173
    %v1175 = vrot.slane %v1168, %v1174
    %v1177 = vunpack.c.l.s4 1966171168
    %v1178 = vunpack.c.0.s8 %v1177
    %v1179 = vlaneseq
    %v1180 = vshrl.u32 %v1179, 7
    %v1181 = vsub.s32 %v1178, %v1180
    %v1182 = vrot.slane %v1175, %v1181
    %v1184 = vmul.f32 %v1117, %v1182
    %v1186 = vlaneseq
    %v1187 = vshrl.u32 %v1186, 7
    %v1188 = vsub.s32 0, %v1187
    %v1189 = vrot.slane %v1184, %v1188
    %v1190 = vlaneseq
    %v1191 = vshrl.u32 %v1190, 7
    %v1192 = vsub.s32 1, %v1191
    %v1193 = vrot.slane %v1184, %v1192
    %v1196 = vmul.f32 %v1134, %v1189
    %v1197 = vmul.f32 %v1135, %v1193
    %v1200 = vcombine.low %v1196, %v1197
    %v1202 = vunpack.c.l.s4 1966171168
    %v1203 = vunpack.c.0.s8 %v1202
    %v1204 = vlaneseq
    %v1205 = vshrl.u32 %v1204, 7
    %v1206 = vsub.s32 %v1203, %v1205
    %v1207 = vrot.slane %v1200, %v1206
    %v1209 = vunpack.c.l.s4 1966171168
    %v1210 = vunpack.c.0.s8 %v1209
    %v1211 = vlaneseq
    %v1212 = vshrl.u32 %v1211, 7
    %v1213 = vsub.s32 %v1210, %v1212
    %v1214 = vrot.slane %v1207, %v1213
    %v1216 = vsub.f32 %v1119, %v1214
    %v1217 = vmul.f32 %v1108, %v1189
    %v1218 = vmul.f32 %v1110, %v1193
    %v1219 = vmul.f32 %v1112, %v1189
    %v1220 = vmul.f32 %v1114, %v1193
    %v1222 = vlaneseq
    %v1223 = vshrl.u32 %v1222, 7
    %v1224 = vsub.s32 0, %v1223
    %v1225 = vrot.slane %v1216, %v1224
    %v1226 = vlaneseq
    %v1227 = vshrl.u32 %v1226, 7
    %v1228 = vsub.s32 1, %v1227
    %v1229 = vrot.slane %v1216, %v1228
    %v1232 = vadd.f32 %v1217, %v1225
    %v1233 = vadd.f32 %v1218, %v1229
    %v1234 = vadd.f32 %v1219, %v1225
    %v1235 = vadd.f32 %v1220, %v1229
    %v1236 = vtanh.pop %v1232
    %v1237 = vtanh.pop %v1233
    %v1238 = vtanh.pop %v1234
    %v1239 = vtanh.pop %v1235
    %v1240 = vpack.c.bf16 %v1238, %v1236
    %v1241 = vpack.c.bf16 %v1239, %v1237
    %v1242 = vld [vmem:[#allocation10] sm:$0xf]
    %v1243 = vld [vmem:[#allocation10 + $0x4] sm:$0xf]
    %v1244 = vld [vmem:[#allocation10 + $0x8] sm:$0xf]
    %v1245 = vld [vmem:[#allocation10 + $0xc] sm:$0xf]
    %v1246 = vld [vmem:[#allocation10 + $0x10] sm:$0xf]
    %v1247 = vld [vmem:[#allocation10 + $0x14] sm:$0xf]
    %v1248 = vld [vmem:[#allocation10 + $0x18] sm:$0xf]
    %v1249 = vld [vmem:[#allocation10 + $0x1c] sm:$0xf]
    %v1250 = vld [vmem:[#allocation10 + $0x20] sm:$0xf]
    %v1251 = vld [vmem:[#allocation10 + $0x24] sm:$0xf]
    %v1252 = vld [vmem:[#allocation10 + $0x28] sm:$0xf]
    %v1253 = vld [vmem:[#allocation10 + $0x2c] sm:$0xf]
    %v1254 = vld [vmem:[#allocation10 + $0x30] sm:$0xf]
    %v1255 = vld [vmem:[#allocation10 + $0x34] sm:$0xf]
    %v1256 = vld [vmem:[#allocation10 + $0x38] sm:$0xf]
    %v1257 = vld [vmem:[#allocation10 + $0x3c] sm:$0xf]
    %v1258 = vld [vmem:[#allocation10 + $0x40] sm:$0xf]
    %v1259 = vld [vmem:[#allocation10 + $0x44] sm:$0xf]
    %v1260 = vld [vmem:[#allocation10 + $0x48] sm:$0xf]
    %v1261 = vld [vmem:[#allocation10 + $0x4c] sm:$0xf]
    %v1262 = vld [vmem:[#allocation10 + $0x50] sm:$0xf]
    %v1263 = vld [vmem:[#allocation10 + $0x54] sm:$0xf]
    %v1264 = vld [vmem:[#allocation10 + $0x58] sm:$0xf]
    %v1265 = vld [vmem:[#allocation10 + $0x5c] sm:$0xf]
    %v1266 = vld [vmem:[#allocation10 + $0x60] sm:$0xf]
    %v1267 = vld [vmem:[#allocation10 + $0x64] sm:$0xf]
    %v1268 = vld [vmem:[#allocation10 + $0x68] sm:$0xf]
    %v1269 = vld [vmem:[#allocation10 + $0x6c] sm:$0xf]
    %v1270 = vld [vmem:[#allocation10 + $0x70] sm:$0xf]
    %v1271 = vld [vmem:[#allocation10 + $0x74] sm:$0xf]
    %v1272 = vld [vmem:[#allocation10 + $0x78] sm:$0xf]
    %v1273 = vld [vmem:[#allocation10 + $0x7c] sm:$0xf]
    %v1306 = vunpack.c.l.b16 %v1242
    %v1307 = vunpack.c.l.b16 %v1243
    %v1308 = vunpack.c.l.b16 %v1244
    %v1309 = vunpack.c.l.b16 %v1245
    %v1310 = vunpack.c.l.b16 %v1246
    %v1311 = vunpack.c.l.b16 %v1247
    %v1312 = vunpack.c.l.b16 %v1248
    %v1313 = vunpack.c.l.b16 %v1249
    %v1314 = vunpack.c.l.b16 %v1250
    %v1315 = vunpack.c.l.b16 %v1251
    %v1316 = vunpack.c.l.b16 %v1252
    %v1317 = vunpack.c.l.b16 %v1253
    %v1318 = vunpack.c.l.b16 %v1254
    %v1319 = vunpack.c.l.b16 %v1255
    %v1320 = vunpack.c.l.b16 %v1256
    %v1321 = vunpack.c.l.b16 %v1257
    %v1322 = vunpack.c.l.b16 %v1258
    %v1323 = vunpack.c.l.b16 %v1259
    %v1324 = vunpack.c.l.b16 %v1260
    %v1325 = vunpack.c.l.b16 %v1261
    %v1326 = vunpack.c.l.b16 %v1262
    %v1327 = vunpack.c.l.b16 %v1263
    %v1328 = vunpack.c.l.b16 %v1264
    %v1329 = vunpack.c.l.b16 %v1265
    %v1330 = vunpack.c.l.b16 %v1266
    %v1331 = vunpack.c.l.b16 %v1267
    %v1332 = vunpack.c.l.b16 %v1268
    %v1333 = vunpack.c.l.b16 %v1269
    %v1334 = vunpack.c.l.b16 %v1270
    %v1335 = vunpack.c.l.b16 %v1271
    %v1336 = vunpack.c.l.b16 %v1272
    %v1337 = vunpack.c.l.b16 %v1273
    %v1338 = vpack.c.b16 %v1307, %v1306
    %v1339 = vpack.c.b16 %v1309, %v1308
    %v1340 = vpack.c.b16 %v1311, %v1310
    %v1341 = vpack.c.b16 %v1313, %v1312
    %v1342 = vpack.c.b16 %v1315, %v1314
    %v1343 = vpack.c.b16 %v1317, %v1316
    %v1344 = vpack.c.b16 %v1319, %v1318
    %v1345 = vpack.c.b16 %v1321, %v1320
    %v1346 = vpack.c.b16 %v1323, %v1322
    %v1347 = vpack.c.b16 %v1325, %v1324
    %v1348 = vpack.c.b16 %v1327, %v1326
    %v1349 = vpack.c.b16 %v1329, %v1328
    %v1350 = vpack.c.b16 %v1331, %v1330
    %v1351 = vpack.c.b16 %v1333, %v1332
    %v1352 = vpack.c.b16 %v1335, %v1334
    %v1353 = vpack.c.b16 %v1337, %v1336
    %1370 = vmatprep.subr.bf16.mxu0 0
    %1371 = vmatpush1.bf16.msra.mxu0 %v1338
    %1372 = vmatprep.subr.bf16.mxu0 0
    %1373 = vmatpush1.bf16.msra.mxu0 %v1339
    %1374 = vmatprep.subr.bf16.mxu0 0
    %1375 = vmatpush1.bf16.msra.mxu0 %v1340
    %1376 = vmatprep.subr.bf16.mxu0 0
    %1377 = vmatpush1.bf16.msra.mxu0 %v1341
    %1378 = vmatprep.subr.bf16.mxu0 0
    %1379 = vmatpush1.bf16.msra.mxu0 %v1342
    %1380 = vmatprep.subr.bf16.mxu0 0
    %1381 = vmatpush1.bf16.msra.mxu0 %v1343
    %1382 = vmatprep.subr.bf16.mxu0 0
    %1383 = vmatpush1.bf16.msra.mxu0 %v1344
    %1384 = vmatprep.subr.bf16.mxu0 0
    %1385 = vmatpush1.bf16.msra.mxu0 %v1345
    %1386 = vmatprep.subr.bf16.mxu0 0
    %1387 = vmatpush1.bf16.msra.mxu0 %v1346
    %1388 = vmatprep.subr.bf16.mxu0 0
    %1389 = vmatpush1.bf16.msra.mxu0 %v1347
    %1390 = vmatprep.subr.bf16.mxu0 0
    %1391 = vmatpush1.bf16.msra.mxu0 %v1348
    %1392 = vmatprep.subr.bf16.mxu0 0
    %1393 = vmatpush1.bf16.msra.mxu0 %v1349
    %1394 = vmatprep.subr.bf16.mxu0 0
    %1395 = vmatpush1.bf16.msra.mxu0 %v1350
    %1396 = vmatprep.subr.bf16.mxu0 0
    %1397 = vmatpush1.bf16.msra.mxu0 %v1351
    %1398 = vmatprep.subr.bf16.mxu0 0
    %1399 = vmatpush1.bf16.msra.mxu0 %v1352
    %1400 = vmatprep.subr.bf16.mxu0 0
    %1401 = vmatpush1.bf16.msra.mxu0 %v1353
    %1402 = vmatprep.mubr.bf16.mxu0 %v1241
    %1403 = vmatmul.mubr.bf16.gmra.mrb[0].mxu0 %v1240
    %v1404 = vpop.f32.mrb[0].mxu0
    %v1405 = vadd.f32 0.0, %v1404
    %v1406 = vpop.f32.mrb[0].mxu0
    %v1407 = vpop.f32.mrb[0].mxu0
    %v1408 = vadd.f32 0.0, %v1407
    %v1409 = vpop.f32.mrb[0].mxu0
    %1410 = vdwg.mxu0
    %v1411 = vld [vmem:[%s6 + $0x5] ss:$0 sm:$0xff]
    %v1412 = vld [vmem:[%s6 + $0x6] ss:$0 sm:$0xff]
    %v1413 = vadd.f32 %v1405, %v1408
    %v1414 = vrot.slane %v1413, 4
    %v1415 = vadd.f32 %v1413, %v1414
    %v1416 = vrot.slane %v1415, 2
    %v1417 = vadd.f32 %v1415, %v1416
    %v1418 = vrot.slane %v1417, 1
    %v1419 = vadd.f32 %v1417, %v1418
    %v1420 = vmul.f32 %v1419, 0.0625
    %v1421 = vmul.f32 %v1405, %v1405
    %v1422 = vmul.f32 %v1408, %v1408
    %v1423 = vadd.f32 %v1421, %v1422
    %v1424 = vrot.slane %v1423, 4
    %v1425 = vadd.f32 %v1423, %v1424
    %v1426 = vrot.slane %v1425, 2
    %v1427 = vadd.f32 %v1425, %v1426
    %v1428 = vrot.slane %v1427, 1
    %v1429 = vadd.f32 %v1427, %v1428
    %v1430 = vmul.f32 %v1429, 0.0625
    %v1431 = vmul.f32 %v1420, %v1420
    %v1432 = vsub.f32 %v1430, %v1431
    %v1433 = vmax.f32 %v1432, 0.0
    %v1434 = vadd.f32 %v1433, 1e-05
    %v1435 = vrsqrt.pop %v1434
    %v1436 = vmul.f32 %v1411, %v1435
    %v1437 = vmul.f32 %v1420, %v1436
    %v1438 = vsub.f32 %v1412, %v1437
    %v1439 = vmul.f32 %v1405, %v1436
    %v1440 = vmul.f32 %v1408, %v1436
    %v1441 = vadd.f32 %v1439, %v1438
    %v1442 = vadd.f32 %v1440, %v1438
    %v1443 = vtanh.pop %v1441
    %v1444 = vtanh.pop %v1442
    %v1445 = vpack.c.bf16 %v1444, %v1443
    %v1446 = vld [vmem:[#allocation11] sm:$0xf]
    %v1447 = vld [vmem:[#allocation11 + $0x4] sm:$0xf]
    %v1448 = vld [vmem:[#allocation11 + $0x8] sm:$0xf]
    %v1449 = vld [vmem:[#allocation11 + $0xc] sm:$0xf]
    %v1450 = vld [vmem:[#allocation11 + $0x10] sm:$0xf]
    %v1451 = vld [vmem:[#allocation11 + $0x14] sm:$0xf]
    %v1452 = vld [vmem:[#allocation11 + $0x18] sm:$0xf]
    %v1453 = vld [vmem:[#allocation11 + $0x1c] sm:$0xf]
    %v1454 = vld [vmem:[#allocation11 + $0x20] sm:$0xf]
    %v1455 = vld [vmem:[#allocation11 + $0x24] sm:$0xf]
    %v1456 = vld [vmem:[#allocation11 + $0x28] sm:$0xf]
    %v1457 = vld [vmem:[#allocation11 + $0x2c] sm:$0xf]
    %v1458 = vld [vmem:[#allocation11 + $0x30] sm:$0xf]
    %v1459 = vld [vmem:[#allocation11 + $0x34] sm:$0xf]
    %v1460 = vld [vmem:[#allocation11 + $0x38] sm:$0xf]
    %v1461 = vld [vmem:[#allocation11 + $0x3c] sm:$0xf]
    %v1478 = vunpack.c.l.b16 %v1446
    %v1479 = vunpack.c.l.b16 %v1447
    %v1480 = vunpack.c.l.b16 %v1448
    %v1481 = vunpack.c.l.b16 %v1449
    %v1482 = vunpack.c.l.b16 %v1450
    %v1483 = vunpack.c.l.b16 %v1451
    %v1484 = vunpack.c.l.b16 %v1452
    %v1485 = vunpack.c.l.b16 %v1453
    %v1486 = vunpack.c.l.b16 %v1454
    %v1487 = vunpack.c.l.b16 %v1455
    %v1488 = vunpack.c.l.b16 %v1456
    %v1489 = vunpack.c.l.b16 %v1457
    %v1490 = vunpack.c.l.b16 %v1458
    %v1491 = vunpack.c.l.b16 %v1459
    %v1492 = vunpack.c.l.b16 %v1460
    %v1493 = vunpack.c.l.b16 %v1461
    %v1494 = vpack.c.b16 %v1479, %v1478
    %v1495 = vpack.c.b16 %v1481, %v1480
    %v1496 = vpack.c.b16 %v1483, %v1482
    %v1497 = vpack.c.b16 %v1485, %v1484
    %v1498 = vpack.c.b16 %v1487, %v1486
    %v1499 = vpack.c.b16 %v1489, %v1488
    %v1500 = vpack.c.b16 %v1491, %v1490
    %v1501 = vpack.c.b16 %v1493, %v1492
    %1510 = vmatprep.subr.bf16.mxu0 0
    %1511 = vmatpush1.bf16.msra.mxu0 %v1494
    %1512 = vmatprep.subr.bf16.mxu0 0
    %1513 = vmatpush1.bf16.msra.mxu0 %v1495
    %1514 = vmatprep.subr.bf16.mxu0 0
    %1515 = vmatpush1.bf16.msra.mxu0 %v1496
    %1516 = vmatprep.subr.bf16.mxu0 0
    %1517 = vmatpush1.bf16.msra.mxu0 %v1497
    %1518 = vmatprep.subr.bf16.mxu0 0
    %1519 = vmatpush1.bf16.msra.mxu0 %v1498
    %1520 = vmatprep.subr.bf16.mxu0 0
    %1521 = vmatpush1.bf16.msra.mxu0 %v1499
    %1522 = vmatprep.subr.bf16.mxu0 0
    %1523 = vmatpush1.bf16.msra.mxu0 %v1500
    %1524 = vmatprep.subr.bf16.mxu0 0
    %1525 = vmatpush1.bf16.msra.mxu0 %v1501
    %1526 = vmatprep.subr.bf16.mxu0 0
    %1527 = vmatpush1.bf16.msra.mxu0 0
    %1528 = vmatprep.subr.bf16.mxu0 0
    %1529 = vmatpush1.bf16.msra.mxu0 0
    %1530 = vmatprep.subr.bf16.mxu0 0
    %1531 = vmatpush1.bf16.msra.mxu0 0
    %1532 = vmatprep.subr.bf16.mxu0 0
    %1533 = vmatpush1.bf16.msra.mxu0 0
    %1534 = vmatprep.subr.bf16.mxu0 0
    %1535 = vmatpush1.bf16.msra.mxu0 0
    %1536 = vmatprep.subr.bf16.mxu0 0
    %1537 = vmatpush1.bf16.msra.mxu0 0
    %1538 = vmatprep.subr.bf16.mxu0 0
    %1539 = vmatpush1.bf16.msra.mxu0 0
    %1540 = vmatprep.subr.bf16.mxu0 0
    %1541 = vmatpush1.bf16.msra.mxu0 0
    %1542 = vmatprep.mubr.bf16.mxu0 0
    %1543 = vmatmul.mubr.bf16.gmra.mrb[0].mxu0 %v1445
    %v1544 = vpop.f32.mrb[0].mxu0
    %v1545 = vadd.f32 0.0, %v1544
    %v1546 = vpop.f32.mrb[0].mxu0
    %v1547 = vpop.f32.mrb[0].mxu0
    %v1548 = vadd.f32 0.0, %v1547
    %v1549 = vpop.f32.mrb[0].mxu0
    %1550 = vdwg.mxu0
    %v1551 = vld [vmem:[%s6 + $0x7] ss:$0 sm:$0xff]
    %v1552 = vadd.f32 %v1545, %v1551
    %v1553 = vadd.f32 %v1548, %v1551
    %v1554 = vxor.u32 %v1552, 2147483648
    %v1555 = vxor.u32 %v1553, 2147483648
    %v1556 = vmul.f32 %v1554, 1.442695
    %v1557 = vpow.pop %v1556
    %v1558 = vmul.f32 %v1555, 1.442695
    %v1559 = vpow.pop %v1558
    %v1560 = vadd.f32 %v1557, 1.0
    %v1561 = vadd.f32 %v1559, 1.0
    %v1562 = vrcp.pop %v1560
    %v1563 = vmul.f32 1.0, %v1562
    %v1564 = vrcp.pop %v1561
    %v1565 = vmul.f32 1.0, %v1564
    %vm1566 = vcmask 7168
    %1567 = vst.msk [vmem:[%s7] sm:$0xff] %vm1566, %v1563
    %1568 = vst.msk [vmem:[%s7 + $0x8] sm:$0xff] %vm1566, %v1565
    // Predicated region
    $region54: #{tpu_custom_call.1} parent=1 // pred_check
      _
    $region55: #{tpu_custom_call.1} parent=1 // pred_check_branch
      %1570 = sbr.rel (0) target = $region57
    $region56: #{tpu_custom_call.1} parent=1 // pred_region
      _
    $region57: #{tpu_custom_call.1} parent=1 // pred_fallthru
      _
    // Predicated region
    $region58: #{tpu_custom_call.1} parent=1 // pred_check
      _
    $region59: #{tpu_custom_call.1} parent=1 // pred_check_branch
      %1572 = sbr.rel (0) target = $region61
    $region60: #{tpu_custom_call.1} parent=1 // pred_region
      _
    $region61: #{tpu_custom_call.1} parent=1 // pred_fallthru
      _
    %1573 = vsyncpa [#allocation4], 1
    %1574 = vsyncpa [#allocation6], 1
    %1575 = vsyncpa [#allocation9], 1
    %1576 = vsyncpa [#allocation12], 1

</llo_original>
